<compile_context>
chip_gen: v6e
topology: v6e:2x2x1
jax: 0.10.0
libtpu: 0.0.40
codegen_flags: <defaults>
</compile_context>

<pallas_src>
import math
import jax
import jax.numpy as jnp
from jax import lax
from jax.experimental import pallas as pl
from jax.experimental.pallas import tpu as pltpu

# ---------------- model hyper-parameters (small, deterministic) --------------
D_MODEL = 32
N_HEADS = 4
D_K = D_MODEL // N_HEADS
D_FF = 64
EPS = 1e-6
NEG_INF = -1e9


# ================================ Pallas kernel ==============================
def _layer_norm(x, g, b):
    # Annotated-Transformer LayerNorm: a2 * (x - mean) / (std + eps) + b2
    # (torch .std() is the unbiased estimator, ddof=1)
    mean = jnp.mean(x, axis=-1, keepdims=True)
    var = jnp.sum((x - mean) ** 2, axis=-1, keepdims=True) / (x.shape[-1] - 1)
    return g * (x - mean) / (jnp.sqrt(var) + EPS) + b


def _encoder_layer_kernel(x_ref, mask_ref,
                          g1_ref, b1_ref, wqkv_ref, bqkv_ref, wo_ref, bo_ref,
                          g2_ref, b2_ref, w1_ref, b1f_ref, w2_ref, b2f_ref,
                          o_ref):
    """One batch element per grid step:  o = FFN-sublayer(Attn-sublayer(x))."""
    x = x_ref[0]                                                    # (S, D) f32

    # ------------------ sublayer 1: x + SelfAttn(LN(x), mask) ----------------
    xn = _layer_norm(x, g1_ref[...], b1_ref[...])                   # f32

    # Fused Q, K, V projection: one lane-dense (S, 3D) MXU output (bf16 inputs).
    qkv = (jnp.dot(xn.astype(jnp.bfloat16), wqkv_ref[...],
                   preferred_element_type=jnp.float32)
           + bqkv_ref[...])                                         # (S, 3D) f32

    # Additive mask bias computed in-kernel from the pad mask (no HBM bias).
    bias = jnp.where(mask_ref[0] != 0.0, 0.0, NEG_INF)              # (1, S)

    scale = 1.0 / math.sqrt(D_K)
    head_outs = []
    for h in range(N_HEADS):                                        # static unroll
        q_h = qkv[:, h * D_K:(h + 1) * D_K].astype(jnp.bfloat16)
        k_h = qkv[:, D_MODEL + h * D_K:D_MODEL + (h + 1) * D_K].astype(jnp.bfloat16)
        v_h = qkv[:, 2 * D_MODEL + h * D_K:2 * D_MODEL + (h + 1) * D_K].astype(jnp.bfloat16)

        s = lax.dot_general(q_h, k_h, (((1,), (1,)), ((), ())),
                            preferred_element_type=jnp.float32) * scale   # (S, S)
        s = s + bias                                                # keys masked
        s = s - jnp.max(s, axis=-1, keepdims=True)                  # f32 softmax
        p = jnp.exp(s)
        p = p * pl.reciprocal(jnp.sum(p, axis=-1, keepdims=True), approx=True)
        head_outs.append(jnp.dot(p.astype(jnp.bfloat16), v_h,
                                 preferred_element_type=jnp.float32))     # (S, d_k)

    # Single output projection over the concatenated heads (one K=D matmul).
    o_cat = jnp.concatenate(head_outs, axis=-1)                     # (S, D) f32
    attn = (jnp.dot(o_cat.astype(jnp.bfloat16), wo_ref[...],
                    preferred_element_type=jnp.float32)
            + bo_ref[...])
    x = x + attn                                                    # residual

    # --------------------- sublayer 2: x + FFN(LN(x)) -------------------------
    xn2 = _layer_norm(x, g2_ref[...], b2_ref[...])
    hdn = (jnp.dot(xn2.astype(jnp.bfloat16), w1_ref[...],
                   preferred_element_type=jnp.float32)
           + b1f_ref[...])
    hdn = jnp.maximum(hdn, 0.0)
    y = (jnp.dot(hdn.astype(jnp.bfloat16), w2_ref[...],
                 preferred_element_type=jnp.float32)
         + b2f_ref[...])
    o_ref[0] = x + y                                                # residual
    # TODO(synk): nn.Dropout has no inference-time effect; omitted (eval mode).


# ============================ pallas_call wrapper ============================
def _const_spec(shape):
    n = len(shape)
    return pl.BlockSpec(shape, lambda b, _n=n: (0,) * _n)


def encoder_layer_forward(params, x, mask):
    """x = x + SelfAttn(LN(x), mask); x = x + FFN(LN(x)).  Dropout = identity."""
    B, S, D = x.shape
    mask3 = mask.reshape(B, 1, S).astype(jnp.float32)   # pad mask over key positions

    return pl.pallas_call(
        _encoder_layer_kernel,
        out_shape=jax.ShapeDtypeStruct((B, S, D), jnp.float32),
        grid=(B,),
        in_specs=[
            pl.BlockSpec((1, S, D), lambda b: (b, 0, 0)),      # x        (per batch)
            pl.BlockSpec((1, 1, S), lambda b: (b, 0, 0)),      # pad mask (per batch)
            _const_spec((1, D)), _const_spec((1, D)),          # LN1 gamma / beta
            _const_spec((D, 3 * D)), _const_spec((1, 3 * D)),  # fused Wqkv / bqkv
            _const_spec((D, D)), _const_spec((1, D)),          # Wo / bo
            _const_spec((1, D)), _const_spec((1, D)),          # LN2 gamma / beta
            _const_spec((D, D_FF)), _const_spec((1, D_FF)),    # W1 / b1
            _const_spec((D_FF, D)), _const_spec((1, D)),       # W2 / b2
        ],
        out_specs=pl.BlockSpec((1, S, D), lambda b: (b, 0, 0)),
        compiler_params=pltpu.CompilerParams(
            dimension_semantics=("parallel",)),
    )(x, mask3,
      params["ln1_g"], params["ln1_b"], params["wqkv"], params["bqkv"],
      params["wo"], params["bo"],
      params["ln2_g"], params["ln2_b"], params["w1"], params["b1"],
      params["w2"], params["b2"])


# ============================== parameter init ===============================
def init_params(key):
    ks = jax.random.split(key, 6)

    def dense(k, din, dout):
        w = jax.random.normal(k, (din, dout), jnp.float32) / math.sqrt(din)
        return w.astype(jnp.bfloat16)                 # bf16 MXU-native weights

    wq = dense(ks[0], D_MODEL, D_MODEL)
    wk = dense(ks[1], D_MODEL, D_MODEL)
    wv = dense(ks[2], D_MODEL, D_MODEL)
    wo = dense(ks[3], D_MODEL, D_MODEL)
    w1 = dense(ks[4], D_MODEL, D_FF)
    w2 = dense(ks[5], D_FF, D_MODEL)

    return dict(
        wqkv=jnp.concatenate([wq, wk, wv], axis=1),   # (D, 3D) bf16, fused QKV
        bqkv=jnp.zeros((1, 3 * D_MODEL), jnp.float32),
        wo=wo, bo=jnp.zeros((1, D_MODEL), jnp.float32),
        w1=w1, b1=jnp.zeros((1, D_FF), jnp.float32),
        w2=w2, b2=jnp.zeros((1, D_MODEL), jnp.float32),
        ln1_g=jnp.ones((1, D_MODEL), jnp.float32),
        ln1_b=jnp.zeros((1, D_MODEL), jnp.float32),
        ln2_g=jnp.ones((1, D_MODEL), jnp.float32),
        ln2_b=jnp.zeros((1, D_MODEL), jnp.float32),
    )


# ==================================== main ===================================
if __name__ == "__main__":
    B, S = 2, 8

    key = jax.random.PRNGKey(0)
    kp, kx = jax.random.split(key)
    params = init_params(kp)
    x = jax.random.normal(kx, (B, S, D_MODEL), jnp.float32)
    # pad mask: batch 0 fully valid, batch 1 has the last two positions padded
    mask = jnp.array([[1, 1, 1, 1, 1, 1, 1, 1],
                      [1, 1, 1, 1, 1, 1, 0, 0]], dtype=jnp.float32).reshape(B, 1, S)

    fwd = jax.jit(encoder_layer_forward)
    out = fwd(params, x, mask)
    out = jax.block_until_ready(out)

    assert out.shape == (B, S, D_MODEL), out.shape
    assert bool(jnp.all(jnp.isfinite(out)))
    print("KERNEL_OK")
</pallas_src>

<mosaic_0001>
module attributes {stable_mosaic.version = 11 : i64} {
  func.func @_encoder_layer_kernel(%arg0: i32, %arg1: memref<1x8x32xf32, #tpu.memory_space<vmem>>, %arg2: memref<1x1x8xf32, #tpu.memory_space<vmem>>, %arg3: memref<1x32xf32, #tpu.memory_space<vmem>>, %arg4: memref<1x32xf32, #tpu.memory_space<vmem>>, %arg5: memref<32x96xbf16, #tpu.memory_space<vmem>>, %arg6: memref<1x96xf32, #tpu.memory_space<vmem>>, %arg7: memref<32x32xbf16, #tpu.memory_space<vmem>>, %arg8: memref<1x32xf32, #tpu.memory_space<vmem>>, %arg9: memref<1x32xf32, #tpu.memory_space<vmem>>, %arg10: memref<1x32xf32, #tpu.memory_space<vmem>>, %arg11: memref<32x64xbf16, #tpu.memory_space<vmem>>, %arg12: memref<1x64xf32, #tpu.memory_space<vmem>>, %arg13: memref<64x32xbf16, #tpu.memory_space<vmem>>, %arg14: memref<1x32xf32, #tpu.memory_space<vmem>>, %arg15: memref<1x8x32xf32, #tpu.memory_space<vmem>>) attributes {dimension_semantics = [#tpu.dimension_semantics<parallel>], iteration_bounds = array<i64: 2>, scalar_prefetch = 0 : i64, scratch_operands = 0 : i64, tpu.core_type = #tpu.core_type<tc>, window_params = [{transform_indices = @transform_0, window_bounds = array<i64: 1, 8, 32>}, {transform_indices = @transform_1, window_bounds = array<i64: 1, 1, 8>}, {pipeline_mode = #tpu.pipeline_mode<synchronous>, transform_indices = @transform_2, window_bounds = array<i64: 1, 32>}, {pipeline_mode = #tpu.pipeline_mode<synchronous>, transform_indices = @transform_3, window_bounds = array<i64: 1, 32>}, {pipeline_mode = #tpu.pipeline_mode<synchronous>, transform_indices = @transform_4, window_bounds = array<i64: 32, 96>}, {pipeline_mode = #tpu.pipeline_mode<synchronous>, transform_indices = @transform_5, window_bounds = array<i64: 1, 96>}, {pipeline_mode = #tpu.pipeline_mode<synchronous>, transform_indices = @transform_6, window_bounds = array<i64: 32, 32>}, {pipeline_mode = #tpu.pipeline_mode<synchronous>, transform_indices = @transform_7, window_bounds = array<i64: 1, 32>}, {pipeline_mode = #tpu.pipeline_mode<synchronous>, transform_indices = @transform_8, window_bounds = array<i64: 1, 32>}, {pipeline_mode = #tpu.pipeline_mode<synchronous>, transform_indices = @transform_9, window_bounds = array<i64: 1, 32>}, {pipeline_mode = #tpu.pipeline_mode<synchronous>, transform_indices = @transform_10, window_bounds = array<i64: 32, 64>}, {pipeline_mode = #tpu.pipeline_mode<synchronous>, transform_indices = @transform_11, window_bounds = array<i64: 1, 64>}, {pipeline_mode = #tpu.pipeline_mode<synchronous>, transform_indices = @transform_12, window_bounds = array<i64: 64, 32>}, {pipeline_mode = #tpu.pipeline_mode<synchronous>, transform_indices = @transform_13, window_bounds = array<i64: 1, 32>}, {transform_indices = @transform_14, window_bounds = array<i64: 1, 8, 32>}]} {
    %c0 = arith.constant 0 : index
    %c0_0 = arith.constant 0 : index
    %c0_1 = arith.constant 0 : index
    %0 = vector.load %arg1[%c0, %c0_0, %c0_1] : memref<1x8x32xf32, #tpu.memory_space<vmem>>, vector<1x8x32xf32>
    %1 = vector.shape_cast %0 : vector<1x8x32xf32> to vector<8x32xf32>
    %c0_2 = arith.constant 0 : index
    %c0_3 = arith.constant 0 : index
    %2 = vector.load %arg3[%c0_2, %c0_3] : memref<1x32xf32, #tpu.memory_space<vmem>>, vector<1x32xf32>
    %c0_4 = arith.constant 0 : index
    %c0_5 = arith.constant 0 : index
    %3 = vector.load %arg4[%c0_4, %c0_5] : memref<1x32xf32, #tpu.memory_space<vmem>>, vector<1x32xf32>
    %cst = arith.constant dense<0.000000e+00> : vector<8xf32>
    %4 = vector.multi_reduction <add>, %1, %cst [1] : vector<8x32xf32> to vector<8xf32>
    %5 = vector.shape_cast %4 : vector<8xf32> to vector<8x1xf32>
    %cst_6 = arith.constant 3.200000e+01 : f32
    %6 = vector.broadcast %cst_6 : f32 to vector<8x1xf32>
    %7 = arith.divf %5, %6 : vector<8x1xf32>
    %8 = vector.broadcast %7 : vector<8x1xf32> to vector<8x32xf32>
    %9 = arith.subf %1, %8 : vector<8x32xf32>
    %10 = arith.mulf %9, %9 : vector<8x32xf32>
    %cst_7 = arith.constant dense<0.000000e+00> : vector<8xf32>
    %11 = vector.multi_reduction <add>, %10, %cst_7 [1] : vector<8x32xf32> to vector<8xf32>
    %12 = vector.shape_cast %11 : vector<8xf32> to vector<8x1xf32>
    %cst_8 = arith.constant 3.100000e+01 : f32
    %13 = vector.broadcast %cst_8 : f32 to vector<8x1xf32>
    %14 = arith.divf %12, %13 : vector<8x1xf32>
    %15 = vector.broadcast %7 : vector<8x1xf32> to vector<8x32xf32>
    %16 = arith.subf %1, %15 : vector<8x32xf32>
    %17 = vector.broadcast %2 : vector<1x32xf32> to vector<8x32xf32>
    %18 = arith.mulf %17, %16 : vector<8x32xf32>
    %19 = math.sqrt %14 : vector<8x1xf32>
    %cst_9 = arith.constant 9.99999997E-7 : f32
    %20 = vector.broadcast %cst_9 : f32 to vector<8x1xf32>
    %21 = arith.addf %19, %20 : vector<8x1xf32>
    %22 = vector.broadcast %21 : vector<8x1xf32> to vector<8x32xf32>
    %23 = arith.divf %18, %22 : vector<8x32xf32>
    %24 = vector.broadcast %3 : vector<1x32xf32> to vector<8x32xf32>
    %25 = arith.addf %23, %24 : vector<8x32xf32>
    %26 = arith.truncf %25 : vector<8x32xf32> to vector<8x32xbf16>
    %c0_10 = arith.constant 0 : index
    %c0_11 = arith.constant 0 : index
    %27 = vector.load %arg5[%c0_10, %c0_11] : memref<32x96xbf16, #tpu.memory_space<vmem>>, vector<32x96xbf16>
    %cst_12 = arith.constant dense<0.000000e+00> : vector<8x96xf32>
    %28 = tpu.matmul %26, %27, %cst_12 {dimension_numbers = #tpu.dot_dimension_numbers<[1], [0], [0], [1], [0, 0, 1, 1], [], []>} : vector<8x32xbf16>, vector<32x96xbf16>, vector<8x96xf32> -> vector<8x96xf32>
    %c0_13 = arith.constant 0 : index
    %c0_14 = arith.constant 0 : index
    %29 = vector.load %arg6[%c0_13, %c0_14] : memref<1x96xf32, #tpu.memory_space<vmem>>, vector<1x96xf32>
    %30 = vector.broadcast %29 : vector<1x96xf32> to vector<8x96xf32>
    %31 = arith.addf %28, %30 : vector<8x96xf32>
    %c0_15 = arith.constant 0 : index
    %c0_16 = arith.constant 0 : index
    %c0_17 = arith.constant 0 : index
    %32 = vector.load %arg2[%c0_15, %c0_16, %c0_17] : memref<1x1x8xf32, #tpu.memory_space<vmem>>, vector<1x1x8xf32>
    %33 = vector.shape_cast %32 : vector<1x1x8xf32> to vector<1x8xf32>
    %cst_18 = arith.constant 0.000000e+00 : f32
    %34 = vector.broadcast %cst_18 : f32 to vector<1x8xf32>
    %35 = arith.cmpf one, %33, %34 : vector<1x8xf32>
    %cst_19 = arith.constant 0.000000e+00 : f32
    %cst_20 = arith.constant -1.000000e+09 : f32
    %36 = vector.broadcast %cst_19 : f32 to vector<1x8xf32>
    %37 = vector.broadcast %cst_20 : f32 to vector<1x8xf32>
    %38 = arith.select %35, %36, %37 : vector<1x8xi1>, vector<1x8xf32>
    %39 = vector.extract_strided_slice %31 {offsets = [0, 0], sizes = [8, 8], strides = [1, 1]} : vector<8x96xf32> to vector<8x8xf32>
    %40 = arith.truncf %39 : vector<8x8xf32> to vector<8x8xbf16>
    %41 = vector.extract_strided_slice %31 {offsets = [0, 32], sizes = [8, 8], strides = [1, 1]} : vector<8x96xf32> to vector<8x8xf32>
    %42 = arith.truncf %41 : vector<8x8xf32> to vector<8x8xbf16>
    %43 = vector.extract_strided_slice %31 {offsets = [0, 64], sizes = [8, 8], strides = [1, 1]} : vector<8x96xf32> to vector<8x8xf32>
    %44 = arith.truncf %43 : vector<8x8xf32> to vector<8x8xbf16>
    %cst_21 = arith.constant dense<0.000000e+00> : vector<8x8xf32>
    %45 = tpu.matmul %40, %42, %cst_21 {dimension_numbers = #tpu.dot_dimension_numbers<[1], [1], [0], [0], [0, 0, 1, 0], [], []>} : vector<8x8xbf16>, vector<8x8xbf16>, vector<8x8xf32> -> vector<8x8xf32>
    %cst_22 = arith.constant 0.353553385 : f32
    %46 = vector.broadcast %cst_22 : f32 to vector<8x8xf32>
    %47 = arith.mulf %45, %46 : vector<8x8xf32>
    %48 = vector.broadcast %38 : vector<1x8xf32> to vector<8x8xf32>
    %49 = arith.addf %47, %48 : vector<8x8xf32>
    %cst_23 = arith.constant dense<0xFF800000> : vector<8xf32>
    %50 = vector.multi_reduction <maximumf>, %49, %cst_23 [1] : vector<8x8xf32> to vector<8xf32>
    %51 = vector.shape_cast %50 : vector<8xf32> to vector<8x1xf32>
    %52 = vector.broadcast %51 : vector<8x1xf32> to vector<8x8xf32>
    %53 = arith.subf %49, %52 : vector<8x8xf32>
    %54 = math.exp %53 : vector<8x8xf32>
    %cst_24 = arith.constant dense<0.000000e+00> : vector<8xf32>
    %55 = vector.multi_reduction <add>, %54, %cst_24 [1] : vector<8x8xf32> to vector<8xf32>
    %56 = vector.shape_cast %55 : vector<8xf32> to vector<8x1xf32>
    %57 = tpu.reciprocal %56 {approx = true} : vector<8x1xf32> -> vector<8x1xf32>
    %58 = vector.broadcast %57 : vector<8x1xf32> to vector<8x8xf32>
    %59 = arith.mulf %54, %58 : vector<8x8xf32>
    %60 = arith.truncf %59 : vector<8x8xf32> to vector<8x8xbf16>
    %cst_25 = arith.constant dense<0.000000e+00> : vector<8x8xf32>
    %61 = tpu.matmul %60, %44, %cst_25 {dimension_numbers = #tpu.dot_dimension_numbers<[1], [0], [0], [1], [0, 0, 1, 1], [], []>} : vector<8x8xbf16>, vector<8x8xbf16>, vector<8x8xf32> -> vector<8x8xf32>
    %62 = vector.extract_strided_slice %31 {offsets = [0, 8], sizes = [8, 8], strides = [1, 1]} : vector<8x96xf32> to vector<8x8xf32>
    %63 = arith.truncf %62 : vector<8x8xf32> to vector<8x8xbf16>
    %64 = vector.extract_strided_slice %31 {offsets = [0, 40], sizes = [8, 8], strides = [1, 1]} : vector<8x96xf32> to vector<8x8xf32>
    %65 = arith.truncf %64 : vector<8x8xf32> to vector<8x8xbf16>
    %66 = vector.extract_strided_slice %31 {offsets = [0, 72], sizes = [8, 8], strides = [1, 1]} : vector<8x96xf32> to vector<8x8xf32>
    %67 = arith.truncf %66 : vector<8x8xf32> to vector<8x8xbf16>
    %cst_26 = arith.constant dense<0.000000e+00> : vector<8x8xf32>
    %68 = tpu.matmul %63, %65, %cst_26 {dimension_numbers = #tpu.dot_dimension_numbers<[1], [1], [0], [0], [0, 0, 1, 0], [], []>} : vector<8x8xbf16>, vector<8x8xbf16>, vector<8x8xf32> -> vector<8x8xf32>
    %cst_27 = arith.constant 0.353553385 : f32
    %69 = vector.broadcast %cst_27 : f32 to vector<8x8xf32>
    %70 = arith.mulf %68, %69 : vector<8x8xf32>
    %71 = vector.broadcast %38 : vector<1x8xf32> to vector<8x8xf32>
    %72 = arith.addf %70, %71 : vector<8x8xf32>
    %cst_28 = arith.constant dense<0xFF800000> : vector<8xf32>
    %73 = vector.multi_reduction <maximumf>, %72, %cst_28 [1] : vector<8x8xf32> to vector<8xf32>
    %74 = vector.shape_cast %73 : vector<8xf32> to vector<8x1xf32>
    %75 = vector.broadcast %74 : vector<8x1xf32> to vector<8x8xf32>
    %76 = arith.subf %72, %75 : vector<8x8xf32>
    %77 = math.exp %76 : vector<8x8xf32>
    %cst_29 = arith.constant dense<0.000000e+00> : vector<8xf32>
    %78 = vector.multi_reduction <add>, %77, %cst_29 [1] : vector<8x8xf32> to vector<8xf32>
    %79 = vector.shape_cast %78 : vector<8xf32> to vector<8x1xf32>
    %80 = tpu.reciprocal %79 {approx = true} : vector<8x1xf32> -> vector<8x1xf32>
    %81 = vector.broadcast %80 : vector<8x1xf32> to vector<8x8xf32>
    %82 = arith.mulf %77, %81 : vector<8x8xf32>
    %83 = arith.truncf %82 : vector<8x8xf32> to vector<8x8xbf16>
    %cst_30 = arith.constant dense<0.000000e+00> : vector<8x8xf32>
    %84 = tpu.matmul %83, %67, %cst_30 {dimension_numbers = #tpu.dot_dimension_numbers<[1], [0], [0], [1], [0, 0, 1, 1], [], []>} : vector<8x8xbf16>, vector<8x8xbf16>, vector<8x8xf32> -> vector<8x8xf32>
    %85 = vector.extract_strided_slice %31 {offsets = [0, 16], sizes = [8, 8], strides = [1, 1]} : vector<8x96xf32> to vector<8x8xf32>
    %86 = arith.truncf %85 : vector<8x8xf32> to vector<8x8xbf16>
    %87 = vector.extract_strided_slice %31 {offsets = [0, 48], sizes = [8, 8], strides = [1, 1]} : vector<8x96xf32> to vector<8x8xf32>
    %88 = arith.truncf %87 : vector<8x8xf32> to vector<8x8xbf16>
    %89 = vector.extract_strided_slice %31 {offsets = [0, 80], sizes = [8, 8], strides = [1, 1]} : vector<8x96xf32> to vector<8x8xf32>
    %90 = arith.truncf %89 : vector<8x8xf32> to vector<8x8xbf16>
    %cst_31 = arith.constant dense<0.000000e+00> : vector<8x8xf32>
    %91 = tpu.matmul %86, %88, %cst_31 {dimension_numbers = #tpu.dot_dimension_numbers<[1], [1], [0], [0], [0, 0, 1, 0], [], []>} : vector<8x8xbf16>, vector<8x8xbf16>, vector<8x8xf32> -> vector<8x8xf32>
    %cst_32 = arith.constant 0.353553385 : f32
    %92 = vector.broadcast %cst_32 : f32 to vector<8x8xf32>
    %93 = arith.mulf %91, %92 : vector<8x8xf32>
    %94 = vector.broadcast %38 : vector<1x8xf32> to vector<8x8xf32>
    %95 = arith.addf %93, %94 : vector<8x8xf32>
    %cst_33 = arith.constant dense<0xFF800000> : vector<8xf32>
    %96 = vector.multi_reduction <maximumf>, %95, %cst_33 [1] : vector<8x8xf32> to vector<8xf32>
    %97 = vector.shape_cast %96 : vector<8xf32> to vector<8x1xf32>
    %98 = vector.broadcast %97 : vector<8x1xf32> to vector<8x8xf32>
    %99 = arith.subf %95, %98 : vector<8x8xf32>
    %100 = math.exp %99 : vector<8x8xf32>
    %cst_34 = arith.constant dense<0.000000e+00> : vector<8xf32>
    %101 = vector.multi_reduction <add>, %100, %cst_34 [1] : vector<8x8xf32> to vector<8xf32>
    %102 = vector.shape_cast %101 : vector<8xf32> to vector<8x1xf32>
    %103 = tpu.reciprocal %102 {approx = true} : vector<8x1xf32> -> vector<8x1xf32>
    %104 = vector.broadcast %103 : vector<8x1xf32> to vector<8x8xf32>
    %105 = arith.mulf %100, %104 : vector<8x8xf32>
    %106 = arith.truncf %105 : vector<8x8xf32> to vector<8x8xbf16>
    %cst_35 = arith.constant dense<0.000000e+00> : vector<8x8xf32>
    %107 = tpu.matmul %106, %90, %cst_35 {dimension_numbers = #tpu.dot_dimension_numbers<[1], [0], [0], [1], [0, 0, 1, 1], [], []>} : vector<8x8xbf16>, vector<8x8xbf16>, vector<8x8xf32> -> vector<8x8xf32>
    %108 = vector.extract_strided_slice %31 {offsets = [0, 24], sizes = [8, 8], strides = [1, 1]} : vector<8x96xf32> to vector<8x8xf32>
    %109 = arith.truncf %108 : vector<8x8xf32> to vector<8x8xbf16>
    %110 = vector.extract_strided_slice %31 {offsets = [0, 56], sizes = [8, 8], strides = [1, 1]} : vector<8x96xf32> to vector<8x8xf32>
    %111 = arith.truncf %110 : vector<8x8xf32> to vector<8x8xbf16>
    %112 = vector.extract_strided_slice %31 {offsets = [0, 88], sizes = [8, 8], strides = [1, 1]} : vector<8x96xf32> to vector<8x8xf32>
    %113 = arith.truncf %112 : vector<8x8xf32> to vector<8x8xbf16>
    %cst_36 = arith.constant dense<0.000000e+00> : vector<8x8xf32>
    %114 = tpu.matmul %109, %111, %cst_36 {dimension_numbers = #tpu.dot_dimension_numbers<[1], [1], [0], [0], [0, 0, 1, 0], [], []>} : vector<8x8xbf16>, vector<8x8xbf16>, vector<8x8xf32> -> vector<8x8xf32>
    %cst_37 = arith.constant 0.353553385 : f32
    %115 = vector.broadcast %cst_37 : f32 to vector<8x8xf32>
    %116 = arith.mulf %114, %115 : vector<8x8xf32>
    %117 = vector.broadcast %38 : vector<1x8xf32> to vector<8x8xf32>
    %118 = arith.addf %116, %117 : vector<8x8xf32>
    %cst_38 = arith.constant dense<0xFF800000> : vector<8xf32>
    %119 = vector.multi_reduction <maximumf>, %118, %cst_38 [1] : vector<8x8xf32> to vector<8xf32>
    %120 = vector.shape_cast %119 : vector<8xf32> to vector<8x1xf32>
    %121 = vector.broadcast %120 : vector<8x1xf32> to vector<8x8xf32>
    %122 = arith.subf %118, %121 : vector<8x8xf32>
    %123 = math.exp %122 : vector<8x8xf32>
    %cst_39 = arith.constant dense<0.000000e+00> : vector<8xf32>
    %124 = vector.multi_reduction <add>, %123, %cst_39 [1] : vector<8x8xf32> to vector<8xf32>
    %125 = vector.shape_cast %124 : vector<8xf32> to vector<8x1xf32>
    %126 = tpu.reciprocal %125 {approx = true} : vector<8x1xf32> -> vector<8x1xf32>
    %127 = vector.broadcast %126 : vector<8x1xf32> to vector<8x8xf32>
    %128 = arith.mulf %123, %127 : vector<8x8xf32>
    %129 = arith.truncf %128 : vector<8x8xf32> to vector<8x8xbf16>
    %cst_40 = arith.constant dense<0.000000e+00> : vector<8x8xf32>
    %130 = tpu.matmul %129, %113, %cst_40 {dimension_numbers = #tpu.dot_dimension_numbers<[1], [0], [0], [1], [0, 0, 1, 1], [], []>} : vector<8x8xbf16>, vector<8x8xbf16>, vector<8x8xf32> -> vector<8x8xf32>
    %131 = tpu.concatenate %61, %84, %107, %130 in 1 : vector<8x8xf32>, vector<8x8xf32>, vector<8x8xf32>, vector<8x8xf32> -> vector<8x32xf32>
    %132 = arith.truncf %131 : vector<8x32xf32> to vector<8x32xbf16>
    %c0_41 = arith.constant 0 : index
    %c0_42 = arith.constant 0 : index
    %133 = vector.load %arg7[%c0_41, %c0_42] : memref<32x32xbf16, #tpu.memory_space<vmem>>, vector<32x32xbf16>
    %cst_43 = arith.constant dense<0.000000e+00> : vector<8x32xf32>
    %134 = tpu.matmul %132, %133, %cst_43 {dimension_numbers = #tpu.dot_dimension_numbers<[1], [0], [0], [1], [0, 0, 1, 1], [], []>} : vector<8x32xbf16>, vector<32x32xbf16>, vector<8x32xf32> -> vector<8x32xf32>
    %c0_44 = arith.constant 0 : index
    %c0_45 = arith.constant 0 : index
    %135 = vector.load %arg8[%c0_44, %c0_45] : memref<1x32xf32, #tpu.memory_space<vmem>>, vector<1x32xf32>
    %136 = vector.broadcast %135 : vector<1x32xf32> to vector<8x32xf32>
    %137 = arith.addf %134, %136 : vector<8x32xf32>
    %138 = arith.addf %1, %137 : vector<8x32xf32>
    %c0_46 = arith.constant 0 : index
    %c0_47 = arith.constant 0 : index
    %139 = vector.load %arg9[%c0_46, %c0_47] : memref<1x32xf32, #tpu.memory_space<vmem>>, vector<1x32xf32>
    %c0_48 = arith.constant 0 : index
    %c0_49 = arith.constant 0 : index
    %140 = vector.load %arg10[%c0_48, %c0_49] : memref<1x32xf32, #tpu.memory_space<vmem>>, vector<1x32xf32>
    %cst_50 = arith.constant dense<0.000000e+00> : vector<8xf32>
    %141 = vector.multi_reduction <add>, %138, %cst_50 [1] : vector<8x32xf32> to vector<8xf32>
    %142 = vector.shape_cast %141 : vector<8xf32> to vector<8x1xf32>
    %cst_51 = arith.constant 3.200000e+01 : f32
    %143 = vector.broadcast %cst_51 : f32 to vector<8x1xf32>
    %144 = arith.divf %142, %143 : vector<8x1xf32>
    %145 = vector.broadcast %144 : vector<8x1xf32> to vector<8x32xf32>
    %146 = arith.subf %138, %145 : vector<8x32xf32>
    %147 = arith.mulf %146, %146 : vector<8x32xf32>
    %cst_52 = arith.constant dense<0.000000e+00> : vector<8xf32>
    %148 = vector.multi_reduction <add>, %147, %cst_52 [1] : vector<8x32xf32> to vector<8xf32>
    %149 = vector.shape_cast %148 : vector<8xf32> to vector<8x1xf32>
    %cst_53 = arith.constant 3.100000e+01 : f32
    %150 = vector.broadcast %cst_53 : f32 to vector<8x1xf32>
    %151 = arith.divf %149, %150 : vector<8x1xf32>
    %152 = vector.broadcast %144 : vector<8x1xf32> to vector<8x32xf32>
    %153 = arith.subf %138, %152 : vector<8x32xf32>
    %154 = vector.broadcast %139 : vector<1x32xf32> to vector<8x32xf32>
    %155 = arith.mulf %154, %153 : vector<8x32xf32>
    %156 = math.sqrt %151 : vector<8x1xf32>
    %cst_54 = arith.constant 9.99999997E-7 : f32
    %157 = vector.broadcast %cst_54 : f32 to vector<8x1xf32>
    %158 = arith.addf %156, %157 : vector<8x1xf32>
    %159 = vector.broadcast %158 : vector<8x1xf32> to vector<8x32xf32>
    %160 = arith.divf %155, %159 : vector<8x32xf32>
    %161 = vector.broadcast %140 : vector<1x32xf32> to vector<8x32xf32>
    %162 = arith.addf %160, %161 : vector<8x32xf32>
    %163 = arith.truncf %162 : vector<8x32xf32> to vector<8x32xbf16>
    %c0_55 = arith.constant 0 : index
    %c0_56 = arith.constant 0 : index
    %164 = vector.load %arg11[%c0_55, %c0_56] : memref<32x64xbf16, #tpu.memory_space<vmem>>, vector<32x64xbf16>
    %cst_57 = arith.constant dense<0.000000e+00> : vector<8x64xf32>
    %165 = tpu.matmul %163, %164, %cst_57 {dimension_numbers = #tpu.dot_dimension_numbers<[1], [0], [0], [1], [0, 0, 1, 1], [], []>} : vector<8x32xbf16>, vector<32x64xbf16>, vector<8x64xf32> -> vector<8x64xf32>
    %c0_58 = arith.constant 0 : index
    %c0_59 = arith.constant 0 : index
    %166 = vector.load %arg12[%c0_58, %c0_59] : memref<1x64xf32, #tpu.memory_space<vmem>>, vector<1x64xf32>
    %167 = vector.broadcast %166 : vector<1x64xf32> to vector<8x64xf32>
    %168 = arith.addf %165, %167 : vector<8x64xf32>
    %cst_60 = arith.constant 0.000000e+00 : f32
    %169 = vector.broadcast %cst_60 : f32 to vector<8x64xf32>
    %170 = arith.maximumf %168, %169 : vector<8x64xf32>
    %171 = arith.truncf %170 : vector<8x64xf32> to vector<8x64xbf16>
    %c0_61 = arith.constant 0 : index
    %c0_62 = arith.constant 0 : index
    %172 = vector.load %arg13[%c0_61, %c0_62] : memref<64x32xbf16, #tpu.memory_space<vmem>>, vector<64x32xbf16>
    %cst_63 = arith.constant dense<0.000000e+00> : vector<8x32xf32>
    %173 = tpu.matmul %171, %172, %cst_63 {dimension_numbers = #tpu.dot_dimension_numbers<[1], [0], [0], [1], [0, 0, 1, 1], [], []>} : vector<8x64xbf16>, vector<64x32xbf16>, vector<8x32xf32> -> vector<8x32xf32>
    %c0_64 = arith.constant 0 : index
    %c0_65 = arith.constant 0 : index
    %174 = vector.load %arg14[%c0_64, %c0_65] : memref<1x32xf32, #tpu.memory_space<vmem>>, vector<1x32xf32>
    %175 = vector.broadcast %174 : vector<1x32xf32> to vector<8x32xf32>
    %176 = arith.addf %173, %175 : vector<8x32xf32>
    %177 = arith.addf %138, %176 : vector<8x32xf32>
    %c0_66 = arith.constant 0 : index
    %c0_67 = arith.constant 0 : index
    %c0_68 = arith.constant 0 : index
    %178 = vector.load %arg15[%c0_66, %c0_67, %c0_68] : memref<1x8x32xf32, #tpu.memory_space<vmem>>, vector<1x8x32xf32>
    %179 = vector.shape_cast %178 : vector<1x8x32xf32> to vector<8x32xf32>
    %180 = vector.shape_cast %177 : vector<8x32xf32> to vector<1x8x32xf32>
    tpu.vector_store %arg15[%c0_66, %c0_67, %c0_68], %180 {strides = array<i32>} : memref<1x8x32xf32, #tpu.memory_space<vmem>>, vector<1x8x32xf32>,
    return
  }
  func.func @transform_0(%arg0: i32) -> (i32, i32, i32) {
    %c0_i32 = arith.constant 0 : i32
    %c0_i32_0 = arith.constant 0 : i32
    %c0_i32_1 = arith.constant 0 : i32
    return %arg0, %c0_i32, %c0_i32_0 : i32, i32, i32
  }
  func.func @transform_1(%arg0: i32) -> (i32, i32, i32) {
    %c0_i32 = arith.constant 0 : i32
    %c0_i32_0 = arith.constant 0 : i32
    %c0_i32_1 = arith.constant 0 : i32
    return %arg0, %c0_i32, %c0_i32_0 : i32, i32, i32
  }
  func.func @transform_2(%arg0: i32) -> (i32, i32) {
    %c0_i32 = arith.constant 0 : i32
    %c0_i32_0 = arith.constant 0 : i32
    %c0_i32_1 = arith.constant 0 : i32
    return %c0_i32, %c0_i32_0 : i32, i32
  }
  func.func @transform_3(%arg0: i32) -> (i32, i32) {
    %c0_i32 = arith.constant 0 : i32
    %c0_i32_0 = arith.constant 0 : i32
    %c0_i32_1 = arith.constant 0 : i32
    return %c0_i32, %c0_i32_0 : i32, i32
  }
  func.func @transform_4(%arg0: i32) -> (i32, i32) {
    %c0_i32 = arith.constant 0 : i32
    %c0_i32_0 = arith.constant 0 : i32
    %c0_i32_1 = arith.constant 0 : i32
    return %c0_i32, %c0_i32_0 : i32, i32
  }
  func.func @transform_5(%arg0: i32) -> (i32, i32) {
    %c0_i32 = arith.constant 0 : i32
    %c0_i32_0 = arith.constant 0 : i32
    %c0_i32_1 = arith.constant 0 : i32
    return %c0_i32, %c0_i32_0 : i32, i32
  }
  func.func @transform_6(%arg0: i32) -> (i32, i32) {
    %c0_i32 = arith.constant 0 : i32
    %c0_i32_0 = arith.constant 0 : i32
    %c0_i32_1 = arith.constant 0 : i32
    return %c0_i32, %c0_i32_0 : i32, i32
  }
  func.func @transform_7(%arg0: i32) -> (i32, i32) {
    %c0_i32 = arith.constant 0 : i32
    %c0_i32_0 = arith.constant 0 : i32
    %c0_i32_1 = arith.constant 0 : i32
    return %c0_i32, %c0_i32_0 : i32, i32
  }
  func.func @transform_8(%arg0: i32) -> (i32, i32) {
    %c0_i32 = arith.constant 0 : i32
    %c0_i32_0 = arith.constant 0 : i32
    %c0_i32_1 = arith.constant 0 : i32
    return %c0_i32, %c0_i32_0 : i32, i32
  }
  func.func @transform_9(%arg0: i32) -> (i32, i32) {
    %c0_i32 = arith.constant 0 : i32
    %c0_i32_0 = arith.constant 0 : i32
    %c0_i32_1 = arith.constant 0 : i32
    return %c0_i32, %c0_i32_0 : i32, i32
  }
  func.func @transform_10(%arg0: i32) -> (i32, i32) {
    %c0_i32 = arith.constant 0 : i32
    %c0_i32_0 = arith.constant 0 : i32
    %c0_i32_1 = arith.constant 0 : i32
    return %c0_i32, %c0_i32_0 : i32, i32
  }
  func.func @transform_11(%arg0: i32) -> (i32, i32) {
    %c0_i32 = arith.constant 0 : i32
    %c0_i32_0 = arith.constant 0 : i32
    %c0_i32_1 = arith.constant 0 : i32
    return %c0_i32, %c0_i32_0 : i32, i32
  }
  func.func @transform_12(%arg0: i32) -> (i32, i32) {
    %c0_i32 = arith.constant 0 : i32
    %c0_i32_0 = arith.constant 0 : i32
    %c0_i32_1 = arith.constant 0 : i32
    return %c0_i32, %c0_i32_0 : i32, i32
  }
  func.func @transform_13(%arg0: i32) -> (i32, i32) {
    %c0_i32 = arith.constant 0 : i32
    %c0_i32_0 = arith.constant 0 : i32
    %c0_i32_1 = arith.constant 0 : i32
    return %c0_i32, %c0_i32_0 : i32, i32
  }
  func.func @transform_14(%arg0: i32) -> (i32, i32, i32) {
    %c0_i32 = arith.constant 0 : i32
    %c0_i32_0 = arith.constant 0 : i32
    %c0_i32_1 = arith.constant 0 : i32
    return %arg0, %c0_i32, %c0_i32_0 : i32, i32, i32
  }
}

</mosaic_0001>

<llo_original>
// kernel: encoder_layer_forward.1
$region0: #{encoder_layer_forward.1}
  #allocation0 [shape = 'u32[]', space=smem, size = 0x4, offset = 0x4, fixed_abs, tag = 'smem constant byte address 0x4 - core index']
  #allocation1 [shape = 'u32[144,128]{1,0:T(1,128)}', space=vmem, size = 0x12000, scoped, tag = 'internal scratch']
  %s0 = inlined_call_operand.vmem [shape: f32[2,8,32], index: 0, kind: input, shape index: {}]
  %s1 = inlined_call_operand.vmem [shape: f32[2,1,8], index: 1, kind: input, shape index: {}]
  %s2 = inlined_call_operand.hbm [shape: f32[1,32], index: 2, kind: input, shape index: {}]
  %s3 = inlined_call_operand.hbm [shape: f32[1,32], index: 3, kind: input, shape index: {}]
  %s4 = inlined_call_operand.vmem [shape: bf16[32,96], index: 4, kind: input, shape index: {}]
  %s5 = inlined_call_operand.hbm [shape: f32[1,96], index: 5, kind: input, shape index: {}]
  %s6 = inlined_call_operand.vmem [shape: bf16[32,32], index: 6, kind: input, shape index: {}]
  %s7 = inlined_call_operand.hbm [shape: f32[1,32], index: 7, kind: input, shape index: {}]
  %s8 = inlined_call_operand.hbm [shape: f32[1,32], index: 8, kind: input, shape index: {}]
  %s9 = inlined_call_operand.hbm [shape: f32[1,32], index: 9, kind: input, shape index: {}]
  %s10 = inlined_call_operand.hbm [shape: bf16[32,64], index: 10, kind: input, shape index: {}]
  %s11 = inlined_call_operand.hbm [shape: f32[1,64], index: 11, kind: input, shape index: {}]
  %s12 = inlined_call_operand.vmem [shape: bf16[64,32], index: 12, kind: input, shape index: {}]
  %s13 = inlined_call_operand.hbm [shape: f32[1,32], index: 13, kind: input, shape index: {}]
  %s14 = inlined_call_operand.hbm [shape: f32[2,8,32], index: 14, kind: output, shape index: {}]
  %s15 = sld [smem:[#allocation0]]
  $region125: #{encoder_layer_forward.1} parent=0
    _
  %s17 = ssub.s32 1, %s15
  %s18 = scalar_select 0, %s17, %s15
  $region1: #{encoder_layer_forward.1} parent=0
    #allocation2 [shape = 'u8[512]{0}', space=vmem, size = 0x400, scoped, tag = 'input window, operand 2, single buffered']
    #allocation3 [shape = 's32[2]{0}', space=sflag, size = 0x8, scoped, tag = 'scoped memory for encoder_layer_forward.1']
    #allocation4 [shape = 's32[2]{0}', space=sflag, size = 0x8, scoped, tag = 'scoped memory for encoder_layer_forward.1']
    #allocation5 [shape = 'u8[512]{0}', space=vmem, size = 0x400, scoped, tag = 'input window, operand 3, single buffered']
    #allocation6 [shape = 's32[1]{0}', space=sflag, size = 0x4, scoped, tag = 'scoped memory for encoder_layer_forward.1']
    #allocation7 [shape = 'u8[512]{0}', space=vmem, size = 0x400, scoped, tag = 'input window, operand 5, single buffered']
    #allocation8 [shape = 'u8[512]{0}', space=vmem, size = 0x400, scoped, tag = 'input window, operand 7, single buffered']
    #allocation9 [shape = 's32[1]{0}', space=sflag, size = 0x4, scoped, tag = 'scoped memory for encoder_layer_forward.1']
    #allocation10 [shape = 'u8[512]{0}', space=vmem, size = 0x400, scoped, tag = 'input window, operand 8, single buffered']
    #allocation11 [shape = 'u8[512]{0}', space=vmem, size = 0x400, scoped, tag = 'input window, operand 9, single buffered']
    #allocation12 [shape = 's32[1]{0}', space=sflag, size = 0x4, scoped, tag = 'scoped memory for encoder_layer_forward.1']
    #allocation13 [shape = 'u8[8192]{0}', space=vmem, size = 0x2000, scoped, tag = 'input window, operand 10, single buffered']
    #allocation14 [shape = 'u8[512]{0}', space=vmem, size = 0x400, scoped, tag = 'input window, operand 11, single buffered']
    #allocation15 [shape = 's32[1]{0}', space=sflag, size = 0x4, scoped, tag = 'scoped memory for encoder_layer_forward.1']
    #allocation16 [shape = 'u8[512]{0}', space=vmem, size = 0x400, scoped, tag = 'input window, operand 13, single buffered']
    #allocation17 [shape = 'u8[8192]{0}', space=vmem, size = 0x2000, scoped, tag = 'output window, operand 0']
    %19 = vsyncpa [#allocation3], 0
    %20 = vsyncpa [#allocation6], 0
    %21 = vsyncpa [#allocation9], 0
    %22 = vsyncpa [#allocation12], 0
    %23 = vsyncpa [#allocation15], 0
    %24 = vsyncpa [#allocation4], 0
    %s25 = scalar_lea.sflag [#allocation4], 1
    %26 = vsyncpa %s25, 0
    loop: start=0, step=1, limit=4
    $region2: #{encoder_layer_forward.1} parent=1 // loop_pre_header
      _
    $region3: #{encoder_layer_forward.1} parent=1 // loop_header
      %s28 = sphi 0, %s32
      %p29 = scmp.ge.s32.totalorder %s28, 4
      %s38 = sphi 0, %s40
      %s41 = sphi 0, %s38
      %s42 = sphi 0, %s41
      %s58 = sphi 0, %s42
      %s64 = sphi 0, %s66
      %s67 = sphi 0, %s64
      %s68 = sphi 0, %s67
      %s84 = sphi 0, %s68
      %s88 = sphi 0, %s88
      %s90 = sphi 0, %s88
      %s91 = sphi 0, %s90
      %s105 = sphi 0, %s91
      %s109 = sphi 0, %s109
      %s111 = sphi 0, %s109
      %s112 = sphi 0, %s111
      %s126 = sphi 0, %s112
      %s130 = sphi 0, %s130
      %s132 = sphi 0, %s130
      %s133 = sphi 0, %s132
      %s147 = sphi 0, %s133
      %s151 = sphi 0, %s151
      %s153 = sphi 0, %s151
      %s154 = sphi 0, %s153
      %s168 = sphi 0, %s154
      %s172 = sphi 0, %s172
      %s174 = sphi 0, %s172
      %s175 = sphi 0, %s174
      %s189 = sphi 0, %s175
      %s193 = sphi 0, %s193
      %s195 = sphi 0, %s193
      %s196 = sphi 0, %s195
      %s210 = sphi 0, %s196
      %s214 = sphi 0, %s214
      %s216 = sphi 0, %s214
      %s217 = sphi 0, %s216
      %s231 = sphi 0, %s217
      %s235 = sphi 0, %s235
      %s237 = sphi 0, %s235
      %s238 = sphi 0, %s237
      %s252 = sphi 0, %s238
      %s256 = sphi 0, %s256
      %s258 = sphi 0, %s256
      %s259 = sphi 0, %s258
      %s273 = sphi 0, %s259
      %s277 = sphi 0, %s277
      %s279 = sphi 0, %s277
      %s280 = sphi 0, %s279
      %s294 = sphi 0, %s280
      %s298 = sphi 0, %s298
      %s300 = sphi 0, %s298
      %s301 = sphi 0, %s300
      %s315 = sphi 0, %s301
      %s319 = sphi 0, %s319
      %s321 = sphi 0, %s319
      %s322 = sphi 0, %s321
      %s336 = sphi 0, %s322
      %s342 = sphi 0, %s344
      %s345 = sphi 0, %s342
      %s346 = sphi 0, %s345
      %s362 = sphi 0, %s346
    $region4: #{encoder_layer_forward.1} parent=1 // loop_header_branch
      %31 = sbr.rel (%p29) target = $region8
    $region5: #{encoder_layer_forward.1} parent=1 // loop_body
      %s33 = ssub.s32 %s28, 1
      %s34 = ssub.s32 %s28, 2
      %s35 = sadd.s32 %s28, 1
      %s36 = ssub.s32 %s28, %s35
      %p37 = scmp.eq.s32.totalorder %s36, 0
      %s39 = sadd.s32 %s38, 1
      %s40 = scalar_select %p37, %s38, %s39
      %p43 = pneg %p37
      %p44 = scmp.eq.s32.totalorder %s28, 1
      %p45 = por %p43, %p44
      %p46 = scmp.ne.s32.totalorder %s38, %s41
      %p47 = scmp.eq.s32.totalorder %s28, 0
      %p48 = por %p46, %p47
      %p49 = scmp.ne.s32.totalorder %s38, %s41
      %p50 = scmp.eq.s32.totalorder %s33, 1
      %p51 = por %p49, %p50
      %p52 = scmp.ne.s32.totalorder %s41, %s42
      %p53 = scmp.eq.s32.totalorder %s33, 0
      %p54 = por %p52, %p53
      %p55 = scmp.ne.s32.totalorder %s41, %s42
      %p56 = scmp.eq.s32.totalorder %s34, 1
      %p57 = por %p55, %p56
      %p59 = scmp.ne.s32.totalorder %s42, %s58
      %p60 = scmp.eq.s32.totalorder %s34, 0
      %p61 = por %p59, %p60
      %s62 = ssub.s32 %s28, %s35
      %p63 = scmp.eq.s32.totalorder %s62, 0
      %s65 = sadd.s32 %s64, 1
      %s66 = scalar_select %p63, %s64, %s65
      %p69 = pneg %p63
      %p70 = scmp.eq.s32.totalorder %s28, 1
      %p71 = por %p69, %p70
      %p72 = scmp.ne.s32.totalorder %s64, %s67
      %p73 = scmp.eq.s32.totalorder %s28, 0
      %p74 = por %p72, %p73
      %p75 = scmp.ne.s32.totalorder %s64, %s67
      %p76 = scmp.eq.s32.totalorder %s33, 1
      %p77 = por %p75, %p76
      %p78 = scmp.ne.s32.totalorder %s67, %s68
      %p79 = scmp.eq.s32.totalorder %s33, 0
      %p80 = por %p78, %p79
      %p81 = scmp.ne.s32.totalorder %s67, %s68
      %p82 = scmp.eq.s32.totalorder %s34, 1
      %p83 = por %p81, %p82
      %p85 = scmp.ne.s32.totalorder %s68, %s84
      %p86 = scmp.eq.s32.totalorder %s34, 0
      %p87 = por %p85, %p86
      %s89 = sadd.s32 %s88, 1
      %p92 = scmp.eq.s32.totalorder %s28, 1
      %p93 = scmp.ne.s32.totalorder %s88, %s90
      %p94 = scmp.eq.s32.totalorder %s28, 0
      %p95 = por %p93, %p94
      %p96 = scmp.ne.s32.totalorder %s88, %s90
      %p97 = scmp.eq.s32.totalorder %s33, 1
      %p98 = por %p96, %p97
      %p99 = scmp.ne.s32.totalorder %s90, %s91
      %p100 = scmp.eq.s32.totalorder %s33, 0
      %p101 = por %p99, %p100
      %p102 = scmp.ne.s32.totalorder %s90, %s91
      %p103 = scmp.eq.s32.totalorder %s34, 1
      %p104 = por %p102, %p103
      %p106 = scmp.ne.s32.totalorder %s91, %s105
      %p107 = scmp.eq.s32.totalorder %s34, 0
      %p108 = por %p106, %p107
      %s110 = sadd.s32 %s109, 1
      %p113 = scmp.eq.s32.totalorder %s28, 1
      %p114 = scmp.ne.s32.totalorder %s109, %s111
      %p115 = scmp.eq.s32.totalorder %s28, 0
      %p116 = por %p114, %p115
      %p117 = scmp.ne.s32.totalorder %s109, %s111
      %p118 = scmp.eq.s32.totalorder %s33, 1
      %p119 = por %p117, %p118
      %p120 = scmp.ne.s32.totalorder %s111, %s112
      %p121 = scmp.eq.s32.totalorder %s33, 0
      %p122 = por %p120, %p121
      %p123 = scmp.ne.s32.totalorder %s111, %s112
      %p124 = scmp.eq.s32.totalorder %s34, 1
      %p125 = por %p123, %p124
      %p127 = scmp.ne.s32.totalorder %s112, %s126
      %p128 = scmp.eq.s32.totalorder %s34, 0
      %p129 = por %p127, %p128
      %s131 = sadd.s32 %s130, 1
      %p134 = scmp.eq.s32.totalorder %s28, 1
      %p135 = scmp.ne.s32.totalorder %s130, %s132
      %p136 = scmp.eq.s32.totalorder %s28, 0
      %p137 = por %p135, %p136
      %p138 = scmp.ne.s32.totalorder %s130, %s132
      %p139 = scmp.eq.s32.totalorder %s33, 1
      %p140 = por %p138, %p139
      %p141 = scmp.ne.s32.totalorder %s132, %s133
      %p142 = scmp.eq.s32.totalorder %s33, 0
      %p143 = por %p141, %p142
      %p144 = scmp.ne.s32.totalorder %s132, %s133
      %p145 = scmp.eq.s32.totalorder %s34, 1
      %p146 = por %p144, %p145
      %p148 = scmp.ne.s32.totalorder %s133, %s147
      %p149 = scmp.eq.s32.totalorder %s34, 0
      %p150 = por %p148, %p149
      %s152 = sadd.s32 %s151, 1
      %p155 = scmp.eq.s32.totalorder %s28, 1
      %p156 = scmp.ne.s32.totalorder %s151, %s153
      %p157 = scmp.eq.s32.totalorder %s28, 0
      %p158 = por %p156, %p157
      %p159 = scmp.ne.s32.totalorder %s151, %s153
      %p160 = scmp.eq.s32.totalorder %s33, 1
      %p161 = por %p159, %p160
      %p162 = scmp.ne.s32.totalorder %s153, %s154
      %p163 = scmp.eq.s32.totalorder %s33, 0
      %p164 = por %p162, %p163
      %p165 = scmp.ne.s32.totalorder %s153, %s154
      %p166 = scmp.eq.s32.totalorder %s34, 1
      %p167 = por %p165, %p166
      %p169 = scmp.ne.s32.totalorder %s154, %s168
      %p170 = scmp.eq.s32.totalorder %s34, 0
      %p171 = por %p169, %p170
      %s173 = sadd.s32 %s172, 1
      %p176 = scmp.eq.s32.totalorder %s28, 1
      %p177 = scmp.ne.s32.totalorder %s172, %s174
      %p178 = scmp.eq.s32.totalorder %s28, 0
      %p179 = por %p177, %p178
      %p180 = scmp.ne.s32.totalorder %s172, %s174
      %p181 = scmp.eq.s32.totalorder %s33, 1
      %p182 = por %p180, %p181
      %p183 = scmp.ne.s32.totalorder %s174, %s175
      %p184 = scmp.eq.s32.totalorder %s33, 0
      %p185 = por %p183, %p184
      %p186 = scmp.ne.s32.totalorder %s174, %s175
      %p187 = scmp.eq.s32.totalorder %s34, 1
      %p188 = por %p186, %p187
      %p190 = scmp.ne.s32.totalorder %s175, %s189
      %p191 = scmp.eq.s32.totalorder %s34, 0
      %p192 = por %p190, %p191
      %s194 = sadd.s32 %s193, 1
      %p197 = scmp.eq.s32.totalorder %s28, 1
      %p198 = scmp.ne.s32.totalorder %s193, %s195
      %p199 = scmp.eq.s32.totalorder %s28, 0
      %p200 = por %p198, %p199
      %p201 = scmp.ne.s32.totalorder %s193, %s195
      %p202 = scmp.eq.s32.totalorder %s33, 1
      %p203 = por %p201, %p202
      %p204 = scmp.ne.s32.totalorder %s195, %s196
      %p205 = scmp.eq.s32.totalorder %s33, 0
      %p206 = por %p204, %p205
      %p207 = scmp.ne.s32.totalorder %s195, %s196
      %p208 = scmp.eq.s32.totalorder %s34, 1
      %p209 = por %p207, %p208
      %p211 = scmp.ne.s32.totalorder %s196, %s210
      %p212 = scmp.eq.s32.totalorder %s34, 0
      %p213 = por %p211, %p212
      %s215 = sadd.s32 %s214, 1
      %p218 = scmp.eq.s32.totalorder %s28, 1
      %p219 = scmp.ne.s32.totalorder %s214, %s216
      %p220 = scmp.eq.s32.totalorder %s28, 0
      %p221 = por %p219, %p220
      %p222 = scmp.ne.s32.totalorder %s214, %s216
      %p223 = scmp.eq.s32.totalorder %s33, 1
      %p224 = por %p222, %p223
      %p225 = scmp.ne.s32.totalorder %s216, %s217
      %p226 = scmp.eq.s32.totalorder %s33, 0
      %p227 = por %p225, %p226
      %p228 = scmp.ne.s32.totalorder %s216, %s217
      %p229 = scmp.eq.s32.totalorder %s34, 1
      %p230 = por %p228, %p229
      %p232 = scmp.ne.s32.totalorder %s217, %s231
      %p233 = scmp.eq.s32.totalorder %s34, 0
      %p234 = por %p232, %p233
      %s236 = sadd.s32 %s235, 1
      %p239 = scmp.eq.s32.totalorder %s28, 1
      %p240 = scmp.ne.s32.totalorder %s235, %s237
      %p241 = scmp.eq.s32.totalorder %s28, 0
      %p242 = por %p240, %p241
      %p243 = scmp.ne.s32.totalorder %s235, %s237
      %p244 = scmp.eq.s32.totalorder %s33, 1
      %p245 = por %p243, %p244
      %p246 = scmp.ne.s32.totalorder %s237, %s238
      %p247 = scmp.eq.s32.totalorder %s33, 0
      %p248 = por %p246, %p247
      %p249 = scmp.ne.s32.totalorder %s237, %s238
      %p250 = scmp.eq.s32.totalorder %s34, 1
      %p251 = por %p249, %p250
      %p253 = scmp.ne.s32.totalorder %s238, %s252
      %p254 = scmp.eq.s32.totalorder %s34, 0
      %p255 = por %p253, %p254
      %s257 = sadd.s32 %s256, 1
      %p260 = scmp.eq.s32.totalorder %s28, 1
      %p261 = scmp.ne.s32.totalorder %s256, %s258
      %p262 = scmp.eq.s32.totalorder %s28, 0
      %p263 = por %p261, %p262
      %p264 = scmp.ne.s32.totalorder %s256, %s258
      %p265 = scmp.eq.s32.totalorder %s33, 1
      %p266 = por %p264, %p265
      %p267 = scmp.ne.s32.totalorder %s258, %s259
      %p268 = scmp.eq.s32.totalorder %s33, 0
      %p269 = por %p267, %p268
      %p270 = scmp.ne.s32.totalorder %s258, %s259
      %p271 = scmp.eq.s32.totalorder %s34, 1
      %p272 = por %p270, %p271
      %p274 = scmp.ne.s32.totalorder %s259, %s273
      %p275 = scmp.eq.s32.totalorder %s34, 0
      %p276 = por %p274, %p275
      %s278 = sadd.s32 %s277, 1
      %p281 = scmp.eq.s32.totalorder %s28, 1
      %p282 = scmp.ne.s32.totalorder %s277, %s279
      %p283 = scmp.eq.s32.totalorder %s28, 0
      %p284 = por %p282, %p283
      %p285 = scmp.ne.s32.totalorder %s277, %s279
      %p286 = scmp.eq.s32.totalorder %s33, 1
      %p287 = por %p285, %p286
      %p288 = scmp.ne.s32.totalorder %s279, %s280
      %p289 = scmp.eq.s32.totalorder %s33, 0
      %p290 = por %p288, %p289
      %p291 = scmp.ne.s32.totalorder %s279, %s280
      %p292 = scmp.eq.s32.totalorder %s34, 1
      %p293 = por %p291, %p292
      %p295 = scmp.ne.s32.totalorder %s280, %s294
      %p296 = scmp.eq.s32.totalorder %s34, 0
      %p297 = por %p295, %p296
      %s299 = sadd.s32 %s298, 1
      %p302 = scmp.eq.s32.totalorder %s28, 1
      %p303 = scmp.ne.s32.totalorder %s298, %s300
      %p304 = scmp.eq.s32.totalorder %s28, 0
      %p305 = por %p303, %p304
      %p306 = scmp.ne.s32.totalorder %s298, %s300
      %p307 = scmp.eq.s32.totalorder %s33, 1
      %p308 = por %p306, %p307
      %p309 = scmp.ne.s32.totalorder %s300, %s301
      %p310 = scmp.eq.s32.totalorder %s33, 0
      %p311 = por %p309, %p310
      %p312 = scmp.ne.s32.totalorder %s300, %s301
      %p313 = scmp.eq.s32.totalorder %s34, 1
      %p314 = por %p312, %p313
      %p316 = scmp.ne.s32.totalorder %s301, %s315
      %p317 = scmp.eq.s32.totalorder %s34, 0
      %p318 = por %p316, %p317
      %s320 = sadd.s32 %s319, 1
      %p323 = scmp.eq.s32.totalorder %s28, 1
      %p324 = scmp.ne.s32.totalorder %s319, %s321
      %p325 = scmp.eq.s32.totalorder %s28, 0
      %p326 = por %p324, %p325
      %p327 = scmp.ne.s32.totalorder %s319, %s321
      %p328 = scmp.eq.s32.totalorder %s33, 1
      %p329 = por %p327, %p328
      %p330 = scmp.ne.s32.totalorder %s321, %s322
      %p331 = scmp.eq.s32.totalorder %s33, 0
      %p332 = por %p330, %p331
      %p333 = scmp.ne.s32.totalorder %s321, %s322
      %p334 = scmp.eq.s32.totalorder %s34, 1
      %p335 = por %p333, %p334
      %p337 = scmp.ne.s32.totalorder %s322, %s336
      %p338 = scmp.eq.s32.totalorder %s34, 0
      %p339 = por %p337, %p338
      %s340 = ssub.s32 %s28, %s35
      %p341 = scmp.eq.s32.totalorder %s340, 0
      %s343 = sadd.s32 %s342, 1
      %s344 = scalar_select %p341, %s342, %s343
      %p347 = pneg %p341
      %p348 = scmp.eq.s32.totalorder %s28, 1
      %p349 = por %p347, %p348
      %p350 = scmp.ne.s32.totalorder %s342, %s345
      %p351 = scmp.eq.s32.totalorder %s28, 0
      %p352 = por %p350, %p351
      %p353 = scmp.ne.s32.totalorder %s342, %s345
      %p354 = scmp.eq.s32.totalorder %s33, 1
      %p355 = por %p353, %p354
      %p356 = scmp.ne.s32.totalorder %s345, %s346
      %p357 = scmp.eq.s32.totalorder %s33, 0
      %p358 = por %p356, %p357
      %p359 = scmp.ne.s32.totalorder %s345, %s346
      %p360 = scmp.eq.s32.totalorder %s34, 1
      %p361 = por %p359, %p360
      %p363 = scmp.ne.s32.totalorder %s346, %s362
      %p364 = scmp.eq.s32.totalorder %s34, 0
      %p365 = por %p363, %p364
      %p366 = scmp.le.s32.totalorder 1, %s28
      %p367 = scmp.lt.s32.totalorder %s28, 3
      %p368 = pnand %p366, %p367
      %p369 = pneg %p368
      // Predicated region
      $region9: #{encoder_layer_forward.1} parent=5 // pred_check
        _
      $region10: #{encoder_layer_forward.1} parent=5 // pred_check_branch
        %371 = sbr.rel (%p368) target = $region12
      $region11: #{encoder_layer_forward.1} parent=5 // pred_region
        %s372 = ssub.s32 %s28, 1
        // Predicated region
        $region13: #{encoder_layer_forward.1} parent=11 // pred_check
          %p373 = pneg %p101
        $region14: #{encoder_layer_forward.1} parent=11 // pred_check_branch
          %375 = sbr.rel (%p373) target = $region16
        $region15: #{encoder_layer_forward.1} parent=11 // pred_region
          %s377 = ssub.s32 16, 16
          %378 = vsyncadd [#allocation3], %s377
          %s380 = sshll.u32 [#allocation2], 4
          %s381 = int_to_ptr.vmem [resolvable:$true] %s380
          %383 = dma.hbm_to_vmem [thread:$0]  %s2, 16, %s381, [#allocation3]
        $region16: #{encoder_layer_forward.1} parent=11 // pred_fallthru
          _
        // Predicated region
        $region17: #{encoder_layer_forward.1} parent=11 // pred_check
          %p384 = pneg %p122
        $region18: #{encoder_layer_forward.1} parent=11 // pred_check_branch
          %386 = sbr.rel (%p384) target = $region20
        $region19: #{encoder_layer_forward.1} parent=11 // pred_region
          %s388 = ssub.s32 16, 16
          %389 = vsyncadd [#allocation6], %s388
          %s391 = sshll.u32 [#allocation5], 4
          %s392 = int_to_ptr.vmem [resolvable:$true] %s391
          %394 = dma.hbm_to_vmem [thread:$0]  %s3, 16, %s392, [#allocation6]
        $region20: #{encoder_layer_forward.1} parent=11 // pred_fallthru
          _
        // Predicated region
        $region21: #{encoder_layer_forward.1} parent=11 // pred_check
          %p395 = pneg %p143
        $region22: #{encoder_layer_forward.1} parent=11 // pred_check_branch
          %397 = sbr.rel (%p395) target = $region24
        $region23: #{encoder_layer_forward.1} parent=11 // pred_region
          _
        $region24: #{encoder_layer_forward.1} parent=11 // pred_fallthru
          _
        // Predicated region
        $region25: #{encoder_layer_forward.1} parent=11 // pred_check
          %p398 = pneg %p164
        $region26: #{encoder_layer_forward.1} parent=11 // pred_check_branch
          %400 = sbr.rel (%p398) target = $region28
        $region27: #{encoder_layer_forward.1} parent=11 // pred_region
          %s402 = ssub.s32 16, 16
          %403 = vsyncadd [#allocation6], %s402
          %s405 = sshll.u32 [#allocation7], 4
          %s406 = int_to_ptr.vmem [resolvable:$true] %s405
          %408 = dma.hbm_to_vmem [thread:$0]  %s5, 16, %s406, [#allocation6]
        $region28: #{encoder_layer_forward.1} parent=11 // pred_fallthru
          _
        // Predicated region
        $region29: #{encoder_layer_forward.1} parent=11 // pred_check
          %p409 = pneg %p185
        $region30: #{encoder_layer_forward.1} parent=11 // pred_check_branch
          %411 = sbr.rel (%p409) target = $region32
        $region31: #{encoder_layer_forward.1} parent=11 // pred_region
          _
        $region32: #{encoder_layer_forward.1} parent=11 // pred_fallthru
          _
        // Predicated region
        $region33: #{encoder_layer_forward.1} parent=11 // pred_check
          %p412 = pneg %p206
        $region34: #{encoder_layer_forward.1} parent=11 // pred_check_branch
          %414 = sbr.rel (%p412) target = $region36
        $region35: #{encoder_layer_forward.1} parent=11 // pred_region
          %s416 = ssub.s32 16, 16
          %417 = vsyncadd [#allocation9], %s416
          %s419 = sshll.u32 [#allocation8], 4
          %s420 = int_to_ptr.vmem [resolvable:$true] %s419
          %422 = dma.hbm_to_vmem [thread:$0]  %s7, 16, %s420, [#allocation9]
        $region36: #{encoder_layer_forward.1} parent=11 // pred_fallthru
          _
        // Predicated region
        $region37: #{encoder_layer_forward.1} parent=11 // pred_check
          %p423 = pneg %p227
        $region38: #{encoder_layer_forward.1} parent=11 // pred_check_branch
          %425 = sbr.rel (%p423) target = $region40
        $region39: #{encoder_layer_forward.1} parent=11 // pred_region
          %s427 = ssub.s32 16, 16
          %428 = vsyncadd [#allocation9], %s427
          %s430 = sshll.u32 [#allocation10], 4
          %s431 = int_to_ptr.vmem [resolvable:$true] %s430
          %433 = dma.hbm_to_vmem [thread:$0]  %s8, 16, %s431, [#allocation9]
        $region40: #{encoder_layer_forward.1} parent=11 // pred_fallthru
          _
        // Predicated region
        $region41: #{encoder_layer_forward.1} parent=11 // pred_check
          %p434 = pneg %p248
        $region42: #{encoder_layer_forward.1} parent=11 // pred_check_branch
          %436 = sbr.rel (%p434) target = $region44
        $region43: #{encoder_layer_forward.1} parent=11 // pred_region
          %s438 = ssub.s32 16, 16
          %439 = vsyncadd [#allocation12], %s438
          %s441 = sshll.u32 [#allocation11], 4
          %s442 = int_to_ptr.vmem [resolvable:$true] %s441
          %444 = dma.hbm_to_vmem [thread:$0]  %s9, 16, %s442, [#allocation12]
        $region44: #{encoder_layer_forward.1} parent=11 // pred_fallthru
          _
        // Predicated region
        $region45: #{encoder_layer_forward.1} parent=11 // pred_check
          %p445 = pneg %p269
        $region46: #{encoder_layer_forward.1} parent=11 // pred_check_branch
          %447 = sbr.rel (%p445) target = $region48
        $region47: #{encoder_layer_forward.1} parent=11 // pred_region
          %s449 = ssub.s32 256, 256
          %450 = vsyncadd [#allocation12], %s449
          %s451 = sshll.u32 [#allocation13], 4
          %s452 = int_to_ptr.vmem [resolvable:$true] %s451
          %457 = dma.hbm_to_vmem [thread:$0]  %s10, 256, %s452, [#allocation12], 64, 64, 4
        $region48: #{encoder_layer_forward.1} parent=11 // pred_fallthru
          _
        // Predicated region
        $region49: #{encoder_layer_forward.1} parent=11 // pred_check
          %p458 = pneg %p290
        $region50: #{encoder_layer_forward.1} parent=11 // pred_check_branch
          %460 = sbr.rel (%p458) target = $region52
        $region51: #{encoder_layer_forward.1} parent=11 // pred_region
          %s462 = ssub.s32 16, 16
          %463 = vsyncadd [#allocation15], %s462
          %s465 = sshll.u32 [#allocation14], 4
          %s466 = int_to_ptr.vmem [resolvable:$true] %s465
          %468 = dma.hbm_to_vmem [thread:$0]  %s11, 16, %s466, [#allocation15]
        $region52: #{encoder_layer_forward.1} parent=11 // pred_fallthru
          _
        // Predicated region
        $region53: #{encoder_layer_forward.1} parent=11 // pred_check
          %p469 = pneg %p311
        $region54: #{encoder_layer_forward.1} parent=11 // pred_check_branch
          %471 = sbr.rel (%p469) target = $region56
        $region55: #{encoder_layer_forward.1} parent=11 // pred_region
          _
        $region56: #{encoder_layer_forward.1} parent=11 // pred_fallthru
          _
        // Predicated region
        $region57: #{encoder_layer_forward.1} parent=11 // pred_check
          %p472 = pneg %p332
        $region58: #{encoder_layer_forward.1} parent=11 // pred_check_branch
          %474 = sbr.rel (%p472) target = $region60
        $region59: #{encoder_layer_forward.1} parent=11 // pred_region
          %s476 = ssub.s32 16, 16
          %477 = vsyncadd [#allocation15], %s476
          %s479 = sshll.u32 [#allocation16], 4
          %s480 = int_to_ptr.vmem [resolvable:$true] %s479
          %482 = dma.hbm_to_vmem [thread:$0]  %s13, 16, %s480, [#allocation15]
        $region60: #{encoder_layer_forward.1} parent=11 // pred_fallthru
          _
      $region12: #{encoder_layer_forward.1} parent=5 // pred_fallthru
        _
      %p483 = scmp.lt.s32.totalorder %s28, 2
      // Predicated region
      $region61: #{encoder_layer_forward.1} parent=5 // pred_check
        %p484 = pneg %p483
      $region62: #{encoder_layer_forward.1} parent=5 // pred_check_branch
        %486 = sbr.rel (%p484) target = $region64
      $region63: #{encoder_layer_forward.1} parent=5 // pred_region
        // Predicated region
        $region65: #{encoder_layer_forward.1} parent=63 // pred_check
          %p487 = pneg %p48
        $region66: #{encoder_layer_forward.1} parent=63 // pred_check_branch
          %489 = sbr.rel (%p487) target = $region68
        $region67: #{encoder_layer_forward.1} parent=63 // pred_region
          %p490 = scmp.lt.s32.totalorder %s28, 1
          %s491 = scalar_select %p490, %s28, 1
          %s492 = smul.addr %s491, 8
          %s493 = scalar_lea.vmem %s0, %s492
        $region68: #{encoder_layer_forward.1} parent=63 // pred_fallthru
          _
        // Predicated region
        $region69: #{encoder_layer_forward.1} parent=63 // pred_check
          %p494 = pneg %p74
        $region70: #{encoder_layer_forward.1} parent=63 // pred_check_branch
          %496 = sbr.rel (%p494) target = $region72
        $region71: #{encoder_layer_forward.1} parent=63 // pred_region
          %p497 = scmp.lt.s32.totalorder %s28, 1
          %s498 = scalar_select %p497, %s28, 1
          %s499 = scalar_lea.vmem %s1, %s498
        $region72: #{encoder_layer_forward.1} parent=63 // pred_fallthru
          _
      $region64: #{encoder_layer_forward.1} parent=5 // pred_fallthru
        _
      %p500 = scmp.le.s32.totalorder 1, %s28
      %p501 = scmp.lt.s32.totalorder %s28, 3
      %p502 = pnand %p500, %p501
      %p503 = pneg %p502
      // Predicated region
      $region73: #{encoder_layer_forward.1} parent=5 // pred_check
        _
      $region74: #{encoder_layer_forward.1} parent=5 // pred_check_branch
        %505 = sbr.rel (%p502) target = $region76
      $region75: #{encoder_layer_forward.1} parent=5 // pred_region
        %s506 = ssub.s32 %s28, 1
        // Predicated region
        $region77: #{encoder_layer_forward.1} parent=75 // pred_check
          %p507 = pneg %p101
        $region78: #{encoder_layer_forward.1} parent=75 // pred_check_branch
          %509 = sbr.rel (%p507) target = $region80
        $region79: #{encoder_layer_forward.1} parent=75 // pred_region
          %510 = dma.done [#allocation3], 16
        $region80: #{encoder_layer_forward.1} parent=75 // pred_fallthru
          _
        // Predicated region
        $region81: #{encoder_layer_forward.1} parent=75 // pred_check
          %p511 = pneg %p122
        $region82: #{encoder_layer_forward.1} parent=75 // pred_check_branch
          %513 = sbr.rel (%p511) target = $region84
        $region83: #{encoder_layer_forward.1} parent=75 // pred_region
          %514 = dma.done [#allocation6], 16
        $region84: #{encoder_layer_forward.1} parent=75 // pred_fallthru
          _
        // Predicated region
        $region85: #{encoder_layer_forward.1} parent=75 // pred_check
          %p515 = pneg %p164
        $region86: #{encoder_layer_forward.1} parent=75 // pred_check_branch
          %517 = sbr.rel (%p515) target = $region88
        $region87: #{encoder_layer_forward.1} parent=75 // pred_region
          %518 = dma.done [#allocation6], 16
        $region88: #{encoder_layer_forward.1} parent=75 // pred_fallthru
          _
        // Predicated region
        $region89: #{encoder_layer_forward.1} parent=75 // pred_check
          %p519 = pneg %p206
        $region90: #{encoder_layer_forward.1} parent=75 // pred_check_branch
          %521 = sbr.rel (%p519) target = $region92
        $region91: #{encoder_layer_forward.1} parent=75 // pred_region
          %522 = dma.done [#allocation9], 16
        $region92: #{encoder_layer_forward.1} parent=75 // pred_fallthru
          _
        // Predicated region
        $region93: #{encoder_layer_forward.1} parent=75 // pred_check
          %p523 = pneg %p227
        $region94: #{encoder_layer_forward.1} parent=75 // pred_check_branch
          %525 = sbr.rel (%p523) target = $region96
        $region95: #{encoder_layer_forward.1} parent=75 // pred_region
          %526 = dma.done [#allocation9], 16
        $region96: #{encoder_layer_forward.1} parent=75 // pred_fallthru
          _
        // Predicated region
        $region97: #{encoder_layer_forward.1} parent=75 // pred_check
          %p527 = pneg %p248
        $region98: #{encoder_layer_forward.1} parent=75 // pred_check_branch
          %529 = sbr.rel (%p527) target = $region100
        $region99: #{encoder_layer_forward.1} parent=75 // pred_region
          %530 = dma.done [#allocation12], 16
        $region100: #{encoder_layer_forward.1} parent=75 // pred_fallthru
          _
        // Predicated region
        $region101: #{encoder_layer_forward.1} parent=75 // pred_check
          %p531 = pneg %p269
        $region102: #{encoder_layer_forward.1} parent=75 // pred_check_branch
          %533 = sbr.rel (%p531) target = $region104
        $region103: #{encoder_layer_forward.1} parent=75 // pred_region
          %534 = dma.done [#allocation12], 256
        $region104: #{encoder_layer_forward.1} parent=75 // pred_fallthru
          _
        // Predicated region
        $region105: #{encoder_layer_forward.1} parent=75 // pred_check
          %p535 = pneg %p290
        $region106: #{encoder_layer_forward.1} parent=75 // pred_check_branch
          %537 = sbr.rel (%p535) target = $region108
        $region107: #{encoder_layer_forward.1} parent=75 // pred_region
          %538 = dma.done [#allocation15], 16
        $region108: #{encoder_layer_forward.1} parent=75 // pred_fallthru
          _
        // Predicated region
        $region109: #{encoder_layer_forward.1} parent=75 // pred_check
          %p539 = pneg %p332
        $region110: #{encoder_layer_forward.1} parent=75 // pred_check_branch
          %541 = sbr.rel (%p539) target = $region112
        $region111: #{encoder_layer_forward.1} parent=75 // pred_region
          %542 = dma.done [#allocation15], 16
        $region112: #{encoder_layer_forward.1} parent=75 // pred_fallthru
          _
        %p543 = scmp.lt.s32.totalorder %s33, 1
        %s544 = scalar_select %p543, %s33, 1
        %s545 = smul.addr %s544, 8
        %s546 = scalar_lea.vmem %s0, %s545
        %p547 = pneg %p54
        %p548 = pneg %p51
        %p549 = scmp.lt.s32.totalorder %s33, 1
        %s550 = scalar_select %p549, %s33, 1
        %s551 = scalar_lea.vmem %s1, %s550
        %p552 = pneg %p80
        %p553 = pneg %p77
        %p554 = pneg %p101
        %p555 = pneg %p98
        %p556 = pneg %p122
        %p557 = pneg %p119
        %p558 = pneg %p143
        %p559 = pneg %p140
        %p560 = pneg %p164
        %p561 = pneg %p161
        %p562 = pneg %p185
        %p563 = pneg %p182
        %p564 = pneg %p206
        %p565 = pneg %p203
        %p566 = pneg %p227
        %p567 = pneg %p224
        %p568 = pneg %p248
        %p569 = pneg %p245
        %p570 = pneg %p269
        %p571 = pneg %p266
        %p572 = pneg %p290
        %p573 = pneg %p287
        %p574 = pneg %p311
        %p575 = pneg %p308
        %p576 = pneg %p332
        %p577 = pneg %p329
        %p578 = pneg %p358
        %p579 = pneg %p355
        %s580 = sand.u32 %s345, 1
        %s581 = scalar_lea.sflag [#allocation4], %s580
        %s582 = sand.u32 %s345, 1
        %s583 = smul.addr %s582, 8
        %s584 = scalar_lea.vmem [#allocation17], %s583
        %p585 = scmp.lt.s32.totalorder %s33, 1
        %s586 = scalar_select %p585, %s33, 1
        %s587 = smul.addr %s586, 8
        %s588 = scalar_lea.vmem %s0, %s587
        %p589 = scmp.lt.s32.totalorder %s33, 1
        %s590 = scalar_select %p589, %s33, 1
        %s591 = scalar_lea.vmem %s1, %s590
        %v593 = vld [vmem:[%s588] sm:$0xff]
        %v594 = vld [vmem:[#allocation2] sm:$0x1]
        %v595 = vld [vmem:[#allocation5] sm:$0x1]
        %vm596 = vcmask 261120
        %v597 = vsel %vm596, %v593, 0.0
        %598 = vadd.xlane.f32.xlu0 %v597
        %v599 = vpop.xlane.xlu0 %598
        %v600 = vrcp.pop 32.0
        %v601 = vmul.f32 %v599, %v600
        %v602 = vsub.f32 %v593, %v601
        %v603 = vmul.f32 %v602, %v602
        %v604 = vsel %vm596, %v603, 0.0
        %605 = vadd.xlane.f32.xlu0 %v604
        %v606 = vpop.xlane.xlu0 %605
        %v607 = vrcp.pop 31.0
        %v608 = vmul.f32 %v606, %v607
        %v610 = vlaneseq
        %v611 = vshrl.u32 %v610, 7
        %v612 = vsub.s32 0, %v611
        %v613 = vrot.slane %v594, %v612
        %v615 = vmul.f32 %v613, %v602
        %v616 = vrsqrt.pop %v608
        %v617 = vmul.f32 %v608, %v616
        %vm618 = vcmp.eq.f32.partialorder %v608, inf
        %v619 = vsel %vm618, %v608, %v617
        %vm620 = vcmp.eq.f32.partialorder %v608, 0.0
        %v621 = vand.u32 %v608, 2147483648
        %v622 = vsel %vm620, %v621, %v619
        %v623 = vadd.f32 %v622, 1e-06
        %v624 = vrcp.pop %v623
        %v625 = vmul.f32 %v615, %v624
        %v627 = vlaneseq
        %v628 = vshrl.u32 %v627, 7
        %v629 = vsub.s32 0, %v628
        %v630 = vrot.slane %v595, %v629
        %v632 = vadd.f32 %v625, %v630
        %v633 = vpack.c.bf16 %v632, %v632
        %v634 = vld [vmem:[%s4] sm:$0xf]
        %v635 = vld [vmem:[%s4 + $0x4] sm:$0xf]
        %v636 = vld [vmem:[%s4 + $0x8] sm:$0xf]
        %v637 = vld [vmem:[%s4 + $0xc] sm:$0xf]
        %v638 = vld [vmem:[#allocation7] sm:$0x1]
        %v640 = vlaneseq
        %v641 = vshrl.u32 %v640, 7
        %v642 = vsub.s32 0, %v641
        %v643 = vrot.slane %v638, %v642
        %v649 = vunpack.c.l.b16 %v634
        %v650 = vunpack.c.l.b16 %v635
        %v651 = vunpack.c.l.b16 %v636
        %v652 = vunpack.c.l.b16 %v637
        %v653 = vpack.c.b16 %v650, %v649
        %v654 = vpack.c.b16 %v652, %v651
        %v658 = vsel %vm596, %v633, 0
        %660 = vmatprep.subr.bf16.mxu0 0
        %661 = vmatpush1.bf16.msra.mxu0 0
        %662 = vmatprep.subr.bf16.mxu0 0
        %663 = vmatpush1.bf16.msra.mxu0 0
        %664 = vmatprep.subr.bf16.mxu0 0
        %665 = vmatpush1.bf16.msra.mxu0 0
        %666 = vmatprep.subr.bf16.mxu0 0
        %667 = vmatpush1.bf16.msra.mxu0 0
        %668 = vmatprep.subr.bf16.mxu0 0
        %669 = vmatpush1.bf16.msra.mxu0 0
        %670 = vmatprep.subr.bf16.mxu0 0
        %671 = vmatpush1.bf16.msra.mxu0 0
        %672 = vmatprep.subr.bf16.mxu0 0
        %673 = vmatpush1.bf16.msra.mxu0 %v654
        %674 = vmatprep.subr.bf16.mxu0 0
        %675 = vmatpush1.bf16.msra.mxu0 %v653
        %676 = vmatprep.subr.bf16.mxu0 0
        %677 = vmatpush2.bf16.msra.mxu0 0
        %678 = vmatprep.subr.bf16.mxu0 0
        %679 = vmatpush2.bf16.msra.mxu0 0
        %680 = vmatprep.subr.bf16.mxu0 0
        %681 = vmatpush2.bf16.msra.mxu0 0
        %682 = vmatprep.subr.bf16.mxu0 0
        %683 = vmatpush2.bf16.msra.mxu0 0
        %684 = vmatprep.subr.bf16.mxu0 0
        %685 = vmatpush2.bf16.msra.mxu0 0
        %686 = vmatprep.subr.bf16.mxu0 0
        %687 = vmatpush2.bf16.msra.mxu0 0
        %688 = vmatprep.subr.bf16.mxu0 0
        %689 = vmatpush2.bf16.msra.mxu0 0
        %690 = vmatprep.subr.bf16.mxu0 0
        %691 = vmatpush2.bf16.msra.mxu0 0
        %692 = vmatprep.mubr.bf16.mxu0 0
        %693 = vmatmul.mubr.bf16.gmra.mxu0 %v658
        %v694 = vpop.f32.mrf.mxu0
        %v695 = vadd.f32 %v643, %v694
        %v696 = vpop.f32.mrf.mxu0
        %v697 = vpop.f32.mrf.mxu0
        %v698 = vpop.f32.mrf.mxu0
        %699 = vdwg.mxu0
        %v700 = vld [vmem:[%s591] sm:$0x1]
        %vm701 = vcmp.ne.f32.partialorder %v700, 0.0
        %v702 = vsel %vm701, 0.0, -1e+09
        %v703 = vpack.c.bf16 %v695, %v695
        %705 = vrot.lane.b32.xlu0 %v703, 96
        %v706 = vpop.permute.xlu0 %705
        %vm707 = vcmask 64512
        %v709 = vsel %vm707, %v703, 0
        %v712 = vsel %vm707, %v706, 0
        %714 = vmatprep.subr.bf16.mxu0 0
        %715 = vmatpush1.bf16.xpose.msra.mxu0 0
        %716 = vmatprep.subr.bf16.mxu0 0
        %717 = vmatpush1.bf16.xpose.msra.mxu0 0
        %718 = vmatprep.subr.bf16.mxu0 0
        %719 = vmatpush1.bf16.xpose.msra.mxu0 0
        %720 = vmatprep.subr.bf16.mxu0 0
        %721 = vmatpush1.bf16.xpose.msra.mxu0 0
        %722 = vmatprep.subr.bf16.mxu0 0
        %723 = vmatpush1.bf16.xpose.msra.mxu0 0
        %724 = vmatprep.subr.bf16.mxu0 0
        %725 = vmatpush1.bf16.xpose.msra.mxu0 0
        %726 = vmatprep.subr.bf16.mxu0 0
        %727 = vmatpush1.bf16.xpose.msra.mxu0 0
        %728 = vmatprep.subr.bf16.mxu0 0
        %729 = vmatpush1.bf16.xpose.msra.mxu0 %v712
        %730 = vmatprep.subr.bf16.mxu0 0
        %731 = vmatpush2.bf16.xpose.msra.mxu0 0
        %732 = vmatprep.subr.bf16.mxu0 0
        %733 = vmatpush2.bf16.xpose.msra.mxu0 0
        %734 = vmatprep.subr.bf16.mxu0 0
        %735 = vmatpush2.bf16.xpose.msra.mxu0 0
        %736 = vmatprep.subr.bf16.mxu0 0
        %737 = vmatpush2.bf16.xpose.msra.mxu0 0
        %738 = vmatprep.subr.bf16.mxu0 0
        %739 = vmatpush2.bf16.xpose.msra.mxu0 0
        %740 = vmatprep.subr.bf16.mxu0 0
        %741 = vmatpush2.bf16.xpose.msra.mxu0 0
        %742 = vmatprep.subr.bf16.mxu0 0
        %743 = vmatpush2.bf16.xpose.msra.mxu0 0
        %744 = vmatprep.subr.bf16.mxu0 0
        %745 = vmatpush2.bf16.xpose.msra.mxu0 0
        %746 = vmatprep.mubr.bf16.mxu0 0
        %747 = vmatmul.mubr.bf16.gmra.mxu0 %v709
        %v748 = vpop.f32.mrf.mxu0
        %v749 = vadd.f32 0.0, %v748
        %v750 = vpop.f32.mrf.mxu0
        %v751 = vpop.f32.mrf.mxu0
        %v752 = vpop.f32.mrf.mxu0
        %753 = vdwg.mxu0
        %v754 = vmul.f32 %v749, 0.35355338
        %v756 = vlaneseq
        %v757 = vshrl.u32 %v756, 7
        %v758 = vsub.s32 0, %v757
        %v759 = vrot.slane %v702, %v758
        %v761 = vadd.f32 %v754, %v759
        %v762 = vsel %vm707, %v761, -inf
        %763 = vmax.xlane.f32.xlu0 %v762
        %v764 = vpop.xlane.xlu0 %763
        %v765 = vsub.f32 %v761, %v764
        %v766 = vmul.f32 %v765, 1.442695
        %v767 = vpow.pop %v766
        %v768 = vsel %vm707, %v767, 0.0
        %769 = vadd.xlane.f32.xlu0 %v768
        %v770 = vpop.xlane.xlu0 %769
        %v771 = vrcp.pop %v770
        %v772 = vmul.f32 %v767, %v771
        %v773 = vpack.c.bf16 %v772, %v772
        %774 = vrot.lane.b32.xlu0 %v703, 64
        %v775 = vpop.permute.xlu0 %774
        %v777 = vsel %vm707, %v773, 0
        %vm779 = vcmask 1043456
        %v781 = vsel %vm779, %v775, 0
        %783 = vmatprep.subr.bf16.mxu0 0
        %784 = vmatpush1.bf16.msra.mxu0 0
        %785 = vmatprep.subr.bf16.mxu0 0
        %786 = vmatpush1.bf16.msra.mxu0 0
        %787 = vmatprep.subr.bf16.mxu0 0
        %788 = vmatpush1.bf16.msra.mxu0 0
        %789 = vmatprep.subr.bf16.mxu0 0
        %790 = vmatpush1.bf16.msra.mxu0 0
        %791 = vmatprep.subr.bf16.mxu0 0
        %792 = vmatpush1.bf16.msra.mxu0 0
        %793 = vmatprep.subr.bf16.mxu0 0
        %794 = vmatpush1.bf16.msra.mxu0 0
        %795 = vmatprep.subr.bf16.mxu0 0
        %796 = vmatpush1.bf16.msra.mxu0 0
        %797 = vmatprep.subr.bf16.mxu0 0
        %798 = vmatpush1.bf16.msra.mxu0 %v781
        %799 = vmatprep.subr.bf16.mxu0 0
        %800 = vmatpush2.bf16.msra.mxu0 0
        %801 = vmatprep.subr.bf16.mxu0 0
        %802 = vmatpush2.bf16.msra.mxu0 0
        %803 = vmatprep.subr.bf16.mxu0 0
        %804 = vmatpush2.bf16.msra.mxu0 0
        %805 = vmatprep.subr.bf16.mxu0 0
        %806 = vmatpush2.bf16.msra.mxu0 0
        %807 = vmatprep.subr.bf16.mxu0 0
        %808 = vmatpush2.bf16.msra.mxu0 0
        %809 = vmatprep.subr.bf16.mxu0 0
        %810 = vmatpush2.bf16.msra.mxu0 0
        %811 = vmatprep.subr.bf16.mxu0 0
        %812 = vmatpush2.bf16.msra.mxu0 0
        %813 = vmatprep.subr.bf16.mxu0 0
        %814 = vmatpush2.bf16.msra.mxu0 0
        %815 = vmatprep.mubr.bf16.mxu0 0
        %816 = vmatmul.mubr.bf16.gmra.mxu0 %v777
        %v817 = vpop.f32.mrf.mxu0
        %v818 = vadd.f32 0.0, %v817
        %v819 = vpop.f32.mrf.mxu0
        %v820 = vpop.f32.mrf.mxu0
        %v821 = vpop.f32.mrf.mxu0
        %822 = vdwg.mxu0
        %823 = vrot.lane.b32.xlu0 %v703, 120
        %v824 = vpop.permute.xlu0 %823
        %825 = vrot.lane.b32.xlu0 %v703, 88
        %v826 = vpop.permute.xlu0 %825
        %v828 = vsel %vm707, %v824, 0
        %v831 = vsel %vm707, %v826, 0
        %833 = vmatprep.subr.bf16.mxu0 0
        %834 = vmatpush1.bf16.xpose.msra.mxu0 0
        %835 = vmatprep.subr.bf16.mxu0 0
        %836 = vmatpush1.bf16.xpose.msra.mxu0 0
        %837 = vmatprep.subr.bf16.mxu0 0
        %838 = vmatpush1.bf16.xpose.msra.mxu0 0
        %839 = vmatprep.subr.bf16.mxu0 0
        %840 = vmatpush1.bf16.xpose.msra.mxu0 0
        %841 = vmatprep.subr.bf16.mxu0 0
        %842 = vmatpush1.bf16.xpose.msra.mxu0 0
        %843 = vmatprep.subr.bf16.mxu0 0
        %844 = vmatpush1.bf16.xpose.msra.mxu0 0
        %845 = vmatprep.subr.bf16.mxu0 0
        %846 = vmatpush1.bf16.xpose.msra.mxu0 0
        %847 = vmatprep.subr.bf16.mxu0 0
        %848 = vmatpush1.bf16.xpose.msra.mxu0 %v831
        %849 = vmatprep.subr.bf16.mxu0 0
        %850 = vmatpush2.bf16.xpose.msra.mxu0 0
        %851 = vmatprep.subr.bf16.mxu0 0
        %852 = vmatpush2.bf16.xpose.msra.mxu0 0
        %853 = vmatprep.subr.bf16.mxu0 0
        %854 = vmatpush2.bf16.xpose.msra.mxu0 0
        %855 = vmatprep.subr.bf16.mxu0 0
        %856 = vmatpush2.bf16.xpose.msra.mxu0 0
        %857 = vmatprep.subr.bf16.mxu0 0
        %858 = vmatpush2.bf16.xpose.msra.mxu0 0
        %859 = vmatprep.subr.bf16.mxu0 0
        %860 = vmatpush2.bf16.xpose.msra.mxu0 0
        %861 = vmatprep.subr.bf16.mxu0 0
        %862 = vmatpush2.bf16.xpose.msra.mxu0 0
        %863 = vmatprep.subr.bf16.mxu0 0
        %864 = vmatpush2.bf16.xpose.msra.mxu0 0
        %865 = vmatprep.mubr.bf16.mxu0 0
        %866 = vmatmul.mubr.bf16.gmra.mxu0 %v828
        %v867 = vpop.f32.mrf.mxu0
        %v868 = vadd.f32 0.0, %v867
        %v869 = vpop.f32.mrf.mxu0
        %v870 = vpop.f32.mrf.mxu0
        %v871 = vpop.f32.mrf.mxu0
        %872 = vdwg.mxu0
        %v873 = vmul.f32 %v868, 0.35355338
        %v874 = vadd.f32 %v873, %v759
        %v875 = vsel %vm707, %v874, -inf
        %876 = vmax.xlane.f32.xlu0 %v875
        %v877 = vpop.xlane.xlu0 %876
        %v878 = vsub.f32 %v874, %v877
        %v879 = vmul.f32 %v878, 1.442695
        %v880 = vpow.pop %v879
        %v881 = vsel %vm707, %v880, 0.0
        %882 = vadd.xlane.f32.xlu0 %v881
        %v883 = vpop.xlane.xlu0 %882
        %v884 = vrcp.pop %v883
        %v885 = vmul.f32 %v880, %v884
        %v886 = vpack.c.bf16 %v885, %v885
        %887 = vrot.lane.b32.xlu0 %v703, 56
        %v888 = vpop.permute.xlu0 %887
        %v890 = vsel %vm707, %v886, 0
        %v893 = vsel %vm779, %v888, 0
        %895 = vmatprep.subr.bf16.mxu0 0
        %896 = vmatpush1.bf16.msra.mxu0 0
        %897 = vmatprep.subr.bf16.mxu0 0
        %898 = vmatpush1.bf16.msra.mxu0 0
        %899 = vmatprep.subr.bf16.mxu0 0
        %900 = vmatpush1.bf16.msra.mxu0 0
        %901 = vmatprep.subr.bf16.mxu0 0
        %902 = vmatpush1.bf16.msra.mxu0 0
        %903 = vmatprep.subr.bf16.mxu0 0
        %904 = vmatpush1.bf16.msra.mxu0 0
        %905 = vmatprep.subr.bf16.mxu0 0
        %906 = vmatpush1.bf16.msra.mxu0 0
        %907 = vmatprep.subr.bf16.mxu0 0
        %908 = vmatpush1.bf16.msra.mxu0 0
        %909 = vmatprep.subr.bf16.mxu0 0
        %910 = vmatpush1.bf16.msra.mxu0 %v893
        %911 = vmatprep.subr.bf16.mxu0 0
        %912 = vmatpush2.bf16.msra.mxu0 0
        %913 = vmatprep.subr.bf16.mxu0 0
        %914 = vmatpush2.bf16.msra.mxu0 0
        %915 = vmatprep.subr.bf16.mxu0 0
        %916 = vmatpush2.bf16.msra.mxu0 0
        %917 = vmatprep.subr.bf16.mxu0 0
        %918 = vmatpush2.bf16.msra.mxu0 0
        %919 = vmatprep.subr.bf16.mxu0 0
        %920 = vmatpush2.bf16.msra.mxu0 0
        %921 = vmatprep.subr.bf16.mxu0 0
        %922 = vmatpush2.bf16.msra.mxu0 0
        %923 = vmatprep.subr.bf16.mxu0 0
        %924 = vmatpush2.bf16.msra.mxu0 0
        %925 = vmatprep.subr.bf16.mxu0 0
        %926 = vmatpush2.bf16.msra.mxu0 0
        %927 = vmatprep.mubr.bf16.mxu0 0
        %928 = vmatmul.mubr.bf16.gmra.mxu0 %v890
        %v929 = vpop.f32.mrf.mxu0
        %v930 = vadd.f32 0.0, %v929
        %v931 = vpop.f32.mrf.mxu0
        %v932 = vpop.f32.mrf.mxu0
        %v933 = vpop.f32.mrf.mxu0
        %934 = vdwg.mxu0
        %935 = vrot.lane.b32.xlu0 %v703, 112
        %v936 = vpop.permute.xlu0 %935
        %937 = vrot.lane.b32.xlu0 %v703, 80
        %v938 = vpop.permute.xlu0 %937
        %v940 = vsel %vm707, %v936, 0
        %v943 = vsel %vm707, %v938, 0
        %945 = vmatprep.subr.bf16.mxu0 0
        %946 = vmatpush1.bf16.xpose.msra.mxu0 0
        %947 = vmatprep.subr.bf16.mxu0 0
        %948 = vmatpush1.bf16.xpose.msra.mxu0 0
        %949 = vmatprep.subr.bf16.mxu0 0
        %950 = vmatpush1.bf16.xpose.msra.mxu0 0
        %951 = vmatprep.subr.bf16.mxu0 0
        %952 = vmatpush1.bf16.xpose.msra.mxu0 0
        %953 = vmatprep.subr.bf16.mxu0 0
        %954 = vmatpush1.bf16.xpose.msra.mxu0 0
        %955 = vmatprep.subr.bf16.mxu0 0
        %956 = vmatpush1.bf16.xpose.msra.mxu0 0
        %957 = vmatprep.subr.bf16.mxu0 0
        %958 = vmatpush1.bf16.xpose.msra.mxu0 0
        %959 = vmatprep.subr.bf16.mxu0 0
        %960 = vmatpush1.bf16.xpose.msra.mxu0 %v943
        %961 = vmatprep.subr.bf16.mxu0 0
        %962 = vmatpush2.bf16.xpose.msra.mxu0 0
        %963 = vmatprep.subr.bf16.mxu0 0
        %964 = vmatpush2.bf16.xpose.msra.mxu0 0
        %965 = vmatprep.subr.bf16.mxu0 0
        %966 = vmatpush2.bf16.xpose.msra.mxu0 0
        %967 = vmatprep.subr.bf16.mxu0 0
        %968 = vmatpush2.bf16.xpose.msra.mxu0 0
        %969 = vmatprep.subr.bf16.mxu0 0
        %970 = vmatpush2.bf16.xpose.msra.mxu0 0
        %971 = vmatprep.subr.bf16.mxu0 0
        %972 = vmatpush2.bf16.xpose.msra.mxu0 0
        %973 = vmatprep.subr.bf16.mxu0 0
        %974 = vmatpush2.bf16.xpose.msra.mxu0 0
        %975 = vmatprep.subr.bf16.mxu0 0
        %976 = vmatpush2.bf16.xpose.msra.mxu0 0
        %977 = vmatprep.mubr.bf16.mxu0 0
        %978 = vmatmul.mubr.bf16.gmra.mxu0 %v940
        %v979 = vpop.f32.mrf.mxu0
        %v980 = vadd.f32 0.0, %v979
        %v981 = vpop.f32.mrf.mxu0
        %v982 = vpop.f32.mrf.mxu0
        %v983 = vpop.f32.mrf.mxu0
        %984 = vdwg.mxu0
        %v985 = vmul.f32 %v980, 0.35355338
        %v986 = vadd.f32 %v985, %v759
        %v987 = vsel %vm707, %v986, -inf
        %988 = vmax.xlane.f32.xlu0 %v987
        %v989 = vpop.xlane.xlu0 %988
        %v990 = vsub.f32 %v986, %v989
        %v991 = vmul.f32 %v990, 1.442695
        %v992 = vpow.pop %v991
        %v993 = vsel %vm707, %v992, 0.0
        %994 = vadd.xlane.f32.xlu0 %v993
        %v995 = vpop.xlane.xlu0 %994
        %v996 = vrcp.pop %v995
        %v997 = vmul.f32 %v992, %v996
        %v998 = vpack.c.bf16 %v997, %v997
        %999 = vrot.lane.b32.xlu0 %v703, 48
        %v1000 = vpop.permute.xlu0 %999
        %v1002 = vsel %vm707, %v998, 0
        %v1005 = vsel %vm779, %v1000, 0
        %1007 = vmatprep.subr.bf16.mxu0 0
        %1008 = vmatpush1.bf16.msra.mxu0 0
        %1009 = vmatprep.subr.bf16.mxu0 0
        %1010 = vmatpush1.bf16.msra.mxu0 0
        %1011 = vmatprep.subr.bf16.mxu0 0
        %1012 = vmatpush1.bf16.msra.mxu0 0
        %1013 = vmatprep.subr.bf16.mxu0 0
        %1014 = vmatpush1.bf16.msra.mxu0 0
        %1015 = vmatprep.subr.bf16.mxu0 0
        %1016 = vmatpush1.bf16.msra.mxu0 0
        %1017 = vmatprep.subr.bf16.mxu0 0
        %1018 = vmatpush1.bf16.msra.mxu0 0
        %1019 = vmatprep.subr.bf16.mxu0 0
        %1020 = vmatpush1.bf16.msra.mxu0 0
        %1021 = vmatprep.subr.bf16.mxu0 0
        %1022 = vmatpush1.bf16.msra.mxu0 %v1005
        %1023 = vmatprep.subr.bf16.mxu0 0
        %1024 = vmatpush2.bf16.msra.mxu0 0
        %1025 = vmatprep.subr.bf16.mxu0 0
        %1026 = vmatpush2.bf16.msra.mxu0 0
        %1027 = vmatprep.subr.bf16.mxu0 0
        %1028 = vmatpush2.bf16.msra.mxu0 0
        %1029 = vmatprep.subr.bf16.mxu0 0
        %1030 = vmatpush2.bf16.msra.mxu0 0
        %1031 = vmatprep.subr.bf16.mxu0 0
        %1032 = vmatpush2.bf16.msra.mxu0 0
        %1033 = vmatprep.subr.bf16.mxu0 0
        %1034 = vmatpush2.bf16.msra.mxu0 0
        %1035 = vmatprep.subr.bf16.mxu0 0
        %1036 = vmatpush2.bf16.msra.mxu0 0
        %1037 = vmatprep.subr.bf16.mxu0 0
        %1038 = vmatpush2.bf16.msra.mxu0 0
        %1039 = vmatprep.mubr.bf16.mxu0 0
        %1040 = vmatmul.mubr.bf16.gmra.mxu0 %v1002
        %v1041 = vpop.f32.mrf.mxu0
        %v1042 = vadd.f32 0.0, %v1041
        %v1043 = vpop.f32.mrf.mxu0
        %v1044 = vpop.f32.mrf.mxu0
        %v1045 = vpop.f32.mrf.mxu0
        %1046 = vdwg.mxu0
        %1047 = vrot.lane.b32.xlu0 %v703, 104
        %v1048 = vpop.permute.xlu0 %1047
        %1049 = vrot.lane.b32.xlu0 %v703, 72
        %v1050 = vpop.permute.xlu0 %1049
        %v1052 = vsel %vm707, %v1048, 0
        %v1055 = vsel %vm707, %v1050, 0
        %1057 = vmatprep.subr.bf16.mxu0 0
        %1058 = vmatpush1.bf16.xpose.msra.mxu0 0
        %1059 = vmatprep.subr.bf16.mxu0 0
        %1060 = vmatpush1.bf16.xpose.msra.mxu0 0
        %1061 = vmatprep.subr.bf16.mxu0 0
        %1062 = vmatpush1.bf16.xpose.msra.mxu0 0
        %1063 = vmatprep.subr.bf16.mxu0 0
        %1064 = vmatpush1.bf16.xpose.msra.mxu0 0
        %1065 = vmatprep.subr.bf16.mxu0 0
        %1066 = vmatpush1.bf16.xpose.msra.mxu0 0
        %1067 = vmatprep.subr.bf16.mxu0 0
        %1068 = vmatpush1.bf16.xpose.msra.mxu0 0
        %1069 = vmatprep.subr.bf16.mxu0 0
        %1070 = vmatpush1.bf16.xpose.msra.mxu0 0
        %1071 = vmatprep.subr.bf16.mxu0 0
        %1072 = vmatpush1.bf16.xpose.msra.mxu0 %v1055
        %1073 = vmatprep.subr.bf16.mxu0 0
        %1074 = vmatpush2.bf16.xpose.msra.mxu0 0
        %1075 = vmatprep.subr.bf16.mxu0 0
        %1076 = vmatpush2.bf16.xpose.msra.mxu0 0
        %1077 = vmatprep.subr.bf16.mxu0 0
        %1078 = vmatpush2.bf16.xpose.msra.mxu0 0
        %1079 = vmatprep.subr.bf16.mxu0 0
        %1080 = vmatpush2.bf16.xpose.msra.mxu0 0
        %1081 = vmatprep.subr.bf16.mxu0 0
        %1082 = vmatpush2.bf16.xpose.msra.mxu0 0
        %1083 = vmatprep.subr.bf16.mxu0 0
        %1084 = vmatpush2.bf16.xpose.msra.mxu0 0
        %1085 = vmatprep.subr.bf16.mxu0 0
        %1086 = vmatpush2.bf16.xpose.msra.mxu0 0
        %1087 = vmatprep.subr.bf16.mxu0 0
        %1088 = vmatpush2.bf16.xpose.msra.mxu0 0
        %1089 = vmatprep.mubr.bf16.mxu0 0
        %1090 = vmatmul.mubr.bf16.gmra.mxu0 %v1052
        %v1091 = vpop.f32.mrf.mxu0
        %v1092 = vadd.f32 0.0, %v1091
        %v1093 = vpop.f32.mrf.mxu0
        %v1094 = vpop.f32.mrf.mxu0
        %v1095 = vpop.f32.mrf.mxu0
        %1096 = vdwg.mxu0
        %v1097 = vmul.f32 %v1092, 0.35355338
        %v1098 = vadd.f32 %v1097, %v759
        %v1099 = vsel %vm707, %v1098, -inf
        %1100 = vmax.xlane.f32.xlu0 %v1099
        %v1101 = vpop.xlane.xlu0 %1100
        %v1102 = vsub.f32 %v1098, %v1101
        %v1103 = vmul.f32 %v1102, 1.442695
        %v1104 = vpow.pop %v1103
        %v1105 = vsel %vm707, %v1104, 0.0
        %1106 = vadd.xlane.f32.xlu0 %v1105
        %v1107 = vpop.xlane.xlu0 %1106
        %v1108 = vrcp.pop %v1107
        %v1109 = vmul.f32 %v1104, %v1108
        %v1110 = vpack.c.bf16 %v1109, %v1109
        %1111 = vrot.lane.b32.xlu0 %v703, 40
        %v1112 = vpop.permute.xlu0 %1111
        %v1114 = vsel %vm707, %v1110, 0
        %v1117 = vsel %vm779, %v1112, 0
        %1119 = vmatprep.subr.bf16.mxu0 0
        %1120 = vmatpush1.bf16.msra.mxu0 0
        %1121 = vmatprep.subr.bf16.mxu0 0
        %1122 = vmatpush1.bf16.msra.mxu0 0
        %1123 = vmatprep.subr.bf16.mxu0 0
        %1124 = vmatpush1.bf16.msra.mxu0 0
        %1125 = vmatprep.subr.bf16.mxu0 0
        %1126 = vmatpush1.bf16.msra.mxu0 0
        %1127 = vmatprep.subr.bf16.mxu0 0
        %1128 = vmatpush1.bf16.msra.mxu0 0
        %1129 = vmatprep.subr.bf16.mxu0 0
        %1130 = vmatpush1.bf16.msra.mxu0 0
        %1131 = vmatprep.subr.bf16.mxu0 0
        %1132 = vmatpush1.bf16.msra.mxu0 0
        %1133 = vmatprep.subr.bf16.mxu0 0
        %1134 = vmatpush1.bf16.msra.mxu0 %v1117
        %1135 = vmatprep.subr.bf16.mxu0 0
        %1136 = vmatpush2.bf16.msra.mxu0 0
        %1137 = vmatprep.subr.bf16.mxu0 0
        %1138 = vmatpush2.bf16.msra.mxu0 0
        %1139 = vmatprep.subr.bf16.mxu0 0
        %1140 = vmatpush2.bf16.msra.mxu0 0
        %1141 = vmatprep.subr.bf16.mxu0 0
        %1142 = vmatpush2.bf16.msra.mxu0 0
        %1143 = vmatprep.subr.bf16.mxu0 0
        %1144 = vmatpush2.bf16.msra.mxu0 0
        %1145 = vmatprep.subr.bf16.mxu0 0
        %1146 = vmatpush2.bf16.msra.mxu0 0
        %1147 = vmatprep.subr.bf16.mxu0 0
        %1148 = vmatpush2.bf16.msra.mxu0 0
        %1149 = vmatprep.subr.bf16.mxu0 0
        %1150 = vmatpush2.bf16.msra.mxu0 0
        %1151 = vmatprep.mubr.bf16.mxu0 0
        %1152 = vmatmul.mubr.bf16.gmra.mxu0 %v1114
        %v1153 = vpop.f32.mrf.mxu0
        %v1154 = vadd.f32 0.0, %v1153
        %v1155 = vpop.f32.mrf.mxu0
        %v1156 = vpop.f32.mrf.mxu0
        %v1157 = vpop.f32.mrf.mxu0
        %1158 = vdwg.mxu0
        %1160 = vrot.lane.b32.xlu0 %v930, 8
        %v1161 = vpop.permute.xlu0 %1160
        %1164 = vrot.lane.b32.xlu0 %v1042, 16
        %v1165 = vpop.permute.xlu0 %1164
        %1168 = vrot.lane.b32.xlu0 %v1154, 24
        %v1169 = vpop.permute.xlu0 %1168
        %v1171 = vsel %vm707, %v818, %v1161
        %vm1172 = vcmask 130048
        %v1173 = vsel %vm1172, %v1171, %v1165
        %vm1174 = vcmask 195584
        %v1175 = vsel %vm1174, %v1173, %v1169
        %v1176 = vpack.c.bf16 %v1175, %v1175
        %v1177 = vld [vmem:[%s6] sm:$0xf]
        %v1178 = vld [vmem:[%s6 + $0x4] sm:$0xf]
        %v1179 = vld [vmem:[%s6 + $0x8] sm:$0xf]
        %v1180 = vld [vmem:[%s6 + $0xc] sm:$0xf]
        %v1181 = vld [vmem:[#allocation8] sm:$0x1]
        %v1183 = vlaneseq
        %v1184 = vshrl.u32 %v1183, 7
        %v1185 = vsub.s32 0, %v1184
        %v1186 = vrot.slane %v1181, %v1185
        %v1192 = vunpack.c.l.b16 %v1177
        %v1193 = vunpack.c.l.b16 %v1178
        %v1194 = vunpack.c.l.b16 %v1179
        %v1195 = vunpack.c.l.b16 %v1180
        %v1196 = vpack.c.b16 %v1193, %v1192
        %v1197 = vpack.c.b16 %v1195, %v1194
        %v1201 = vsel %vm596, %v1176, 0
        %1203 = vmatprep.subr.bf16.mxu0 0
        %1204 = vmatpush1.bf16.msra.mxu0 0
        %1205 = vmatprep.subr.bf16.mxu0 0
        %1206 = vmatpush1.bf16.msra.mxu0 0
        %1207 = vmatprep.subr.bf16.mxu0 0
        %1208 = vmatpush1.bf16.msra.mxu0 0
        %1209 = vmatprep.subr.bf16.mxu0 0
        %1210 = vmatpush1.bf16.msra.mxu0 0
        %1211 = vmatprep.subr.bf16.mxu0 0
        %1212 = vmatpush1.bf16.msra.mxu0 0
        %1213 = vmatprep.subr.bf16.mxu0 0
        %1214 = vmatpush1.bf16.msra.mxu0 0
        %1215 = vmatprep.subr.bf16.mxu0 0
        %1216 = vmatpush1.bf16.msra.mxu0 %v1197
        %1217 = vmatprep.subr.bf16.mxu0 0
        %1218 = vmatpush1.bf16.msra.mxu0 %v1196
        %1219 = vmatprep.subr.bf16.mxu0 0
        %1220 = vmatpush2.bf16.msra.mxu0 0
        %1221 = vmatprep.subr.bf16.mxu0 0
        %1222 = vmatpush2.bf16.msra.mxu0 0
        %1223 = vmatprep.subr.bf16.mxu0 0
        %1224 = vmatpush2.bf16.msra.mxu0 0
        %1225 = vmatprep.subr.bf16.mxu0 0
        %1226 = vmatpush2.bf16.msra.mxu0 0
        %1227 = vmatprep.subr.bf16.mxu0 0
        %1228 = vmatpush2.bf16.msra.mxu0 0
        %1229 = vmatprep.subr.bf16.mxu0 0
        %1230 = vmatpush2.bf16.msra.mxu0 0
        %1231 = vmatprep.subr.bf16.mxu0 0
        %1232 = vmatpush2.bf16.msra.mxu0 0
        %1233 = vmatprep.subr.bf16.mxu0 0
        %1234 = vmatpush2.bf16.msra.mxu0 0
        %1235 = vmatprep.mubr.bf16.mxu0 0
        %1236 = vmatmul.mubr.bf16.gmra.mxu0 %v1201
        %v1237 = vpop.f32.mrf.mxu0
        %v1238 = vadd.f32 %v1186, %v1237
        %v1239 = vpop.f32.mrf.mxu0
        %v1240 = vpop.f32.mrf.mxu0
        %v1241 = vpop.f32.mrf.mxu0
        %1242 = vdwg.mxu0
        %v1243 = vadd.f32 %v593, %v1238
        %v1244 = vld [vmem:[#allocation10] sm:$0x1]
        %v1245 = vld [vmem:[#allocation11] sm:$0x1]
        %v1246 = vsel %vm596, %v1243, 0.0
        %1247 = vadd.xlane.f32.xlu0 %v1246
        %v1248 = vpop.xlane.xlu0 %1247
        %v1249 = vmul.f32 %v1248, %v600
        %v1250 = vsub.f32 %v1243, %v1249
        %v1251 = vmul.f32 %v1250, %v1250
        %v1252 = vsel %vm596, %v1251, 0.0
        %1253 = vadd.xlane.f32.xlu0 %v1252
        %v1254 = vpop.xlane.xlu0 %1253
        %v1255 = vmul.f32 %v1254, %v607
        %v1257 = vlaneseq
        %v1258 = vshrl.u32 %v1257, 7
        %v1259 = vsub.s32 0, %v1258
        %v1260 = vrot.slane %v1244, %v1259
        %v1262 = vmul.f32 %v1260, %v1250
        %v1263 = vrsqrt.pop %v1255
        %v1264 = vmul.f32 %v1255, %v1263
        %vm1265 = vcmp.eq.f32.partialorder %v1255, inf
        %v1266 = vsel %vm1265, %v1255, %v1264
        %vm1267 = vcmp.eq.f32.partialorder %v1255, 0.0
        %v1268 = vand.u32 %v1255, 2147483648
        %v1269 = vsel %vm1267, %v1268, %v1266
        %v1270 = vadd.f32 %v1269, 1e-06
        %v1271 = vrcp.pop %v1270
        %v1272 = vmul.f32 %v1262, %v1271
        %v1274 = vlaneseq
        %v1275 = vshrl.u32 %v1274, 7
        %v1276 = vsub.s32 0, %v1275
        %v1277 = vrot.slane %v1245, %v1276
        %v1279 = vadd.f32 %v1272, %v1277
        %v1280 = vpack.c.bf16 %v1279, %v1279
        %v1281 = vld [vmem:[#allocation13] sm:$0xf]
        %v1282 = vld [vmem:[#allocation13 + $0x4] sm:$0xf]
        %v1283 = vld [vmem:[#allocation13 + $0x8] sm:$0xf]
        %v1284 = vld [vmem:[#allocation13 + $0xc] sm:$0xf]
        %v1285 = vld [vmem:[#allocation14] sm:$0x1]
        %v1287 = vlaneseq
        %v1288 = vshrl.u32 %v1287, 7
        %v1289 = vsub.s32 0, %v1288
        %v1290 = vrot.slane %v1285, %v1289
        %v1296 = vunpack.c.l.b16 %v1281
        %v1297 = vunpack.c.l.b16 %v1282
        %v1298 = vunpack.c.l.b16 %v1283
        %v1299 = vunpack.c.l.b16 %v1284
        %v1300 = vpack.c.b16 %v1297, %v1296
        %v1301 = vpack.c.b16 %v1299, %v1298
        %v1305 = vsel %vm596, %v1280, 0
        %1307 = vmatprep.subr.bf16.mxu0 0
        %1308 = vmatpush1.bf16.msra.mxu0 0
        %1309 = vmatprep.subr.bf16.mxu0 0
        %1310 = vmatpush1.bf16.msra.mxu0 0
        %1311 = vmatprep.subr.bf16.mxu0 0
        %1312 = vmatpush1.bf16.msra.mxu0 0
        %1313 = vmatprep.subr.bf16.mxu0 0
        %1314 = vmatpush1.bf16.msra.mxu0 0
        %1315 = vmatprep.subr.bf16.mxu0 0
        %1316 = vmatpush1.bf16.msra.mxu0 0
        %1317 = vmatprep.subr.bf16.mxu0 0
        %1318 = vmatpush1.bf16.msra.mxu0 0
        %1319 = vmatprep.subr.bf16.mxu0 0
        %1320 = vmatpush1.bf16.msra.mxu0 %v1301
        %1321 = vmatprep.subr.bf16.mxu0 0
        %1322 = vmatpush1.bf16.msra.mxu0 %v1300
        %1323 = vmatprep.subr.bf16.mxu0 0
        %1324 = vmatpush2.bf16.msra.mxu0 0
        %1325 = vmatprep.subr.bf16.mxu0 0
        %1326 = vmatpush2.bf16.msra.mxu0 0
        %1327 = vmatprep.subr.bf16.mxu0 0
        %1328 = vmatpush2.bf16.msra.mxu0 0
        %1329 = vmatprep.subr.bf16.mxu0 0
        %1330 = vmatpush2.bf16.msra.mxu0 0
        %1331 = vmatprep.subr.bf16.mxu0 0
        %1332 = vmatpush2.bf16.msra.mxu0 0
        %1333 = vmatprep.subr.bf16.mxu0 0
        %1334 = vmatpush2.bf16.msra.mxu0 0
        %1335 = vmatprep.subr.bf16.mxu0 0
        %1336 = vmatpush2.bf16.msra.mxu0 0
        %1337 = vmatprep.subr.bf16.mxu0 0
        %1338 = vmatpush2.bf16.msra.mxu0 0
        %1339 = vmatprep.mubr.bf16.mxu0 0
        %1340 = vmatmul.mubr.bf16.gmra.mxu0 %v1305
        %v1341 = vpop.f32.mrf.mxu0
        %v1342 = vadd.f32 %v1290, %v1341
        %v1343 = vpop.f32.mrf.mxu0
        %v1344 = vpop.f32.mrf.mxu0
        %v1345 = vpop.f32.mrf.mxu0
        %1346 = vdwg.mxu0
        %v1347 = vmax.f32 %v1342, 0.0
        %v1348 = vpack.c.bf16 %v1347, %v1347
        %v1349 = vld [vmem:[%s12] sm:$0xf]
        %v1350 = vld [vmem:[%s12 + $0x4] sm:$0xf]
        %v1351 = vld [vmem:[%s12 + $0x8] sm:$0xf]
        %v1352 = vld [vmem:[%s12 + $0xc] sm:$0xf]
        %v1353 = vld [vmem:[%s12 + $0x10] sm:$0xf]
        %v1354 = vld [vmem:[%s12 + $0x14] sm:$0xf]
        %v1355 = vld [vmem:[%s12 + $0x18] sm:$0xf]
        %v1356 = vld [vmem:[%s12 + $0x1c] sm:$0xf]
        %v1357 = vld [vmem:[#allocation16] sm:$0x1]
        %v1359 = vlaneseq
        %v1360 = vshrl.u32 %v1359, 7
        %v1361 = vsub.s32 0, %v1360
        %v1362 = vrot.slane %v1357, %v1361
        %v1372 = vunpack.c.l.b16 %v1349
        %v1373 = vunpack.c.l.b16 %v1350
        %v1374 = vunpack.c.l.b16 %v1351
        %v1375 = vunpack.c.l.b16 %v1352
        %v1376 = vunpack.c.l.b16 %v1353
        %v1377 = vunpack.c.l.b16 %v1354
        %v1378 = vunpack.c.l.b16 %v1355
        %v1379 = vunpack.c.l.b16 %v1356
        %v1380 = vpack.c.b16 %v1373, %v1372
        %v1381 = vpack.c.b16 %v1375, %v1374
        %v1382 = vpack.c.b16 %v1377, %v1376
        %v1383 = vpack.c.b16 %v1379, %v1378
        %vm1388 = vcmask 523264
        %v1390 = vsel %vm1388, %v1348, 0
        %1392 = vmatprep.subr.bf16.mxu0 0
        %1393 = vmatpush1.bf16.msra.mxu0 0
        %1394 = vmatprep.subr.bf16.mxu0 0
        %1395 = vmatpush1.bf16.msra.mxu0 0
        %1396 = vmatprep.subr.bf16.mxu0 0
        %1397 = vmatpush1.bf16.msra.mxu0 0
        %1398 = vmatprep.subr.bf16.mxu0 0
        %1399 = vmatpush1.bf16.msra.mxu0 0
        %1400 = vmatprep.subr.bf16.mxu0 0
        %1401 = vmatpush1.bf16.msra.mxu0 %v1383
        %1402 = vmatprep.subr.bf16.mxu0 0
        %1403 = vmatpush1.bf16.msra.mxu0 %v1382
        %1404 = vmatprep.subr.bf16.mxu0 0
        %1405 = vmatpush1.bf16.msra.mxu0 %v1381
        %1406 = vmatprep.subr.bf16.mxu0 0
        %1407 = vmatpush1.bf16.msra.mxu0 %v1380
        %1408 = vmatprep.subr.bf16.mxu0 0
        %1409 = vmatpush2.bf16.msra.mxu0 0
        %1410 = vmatprep.subr.bf16.mxu0 0
        %1411 = vmatpush2.bf16.msra.mxu0 0
        %1412 = vmatprep.subr.bf16.mxu0 0
        %1413 = vmatpush2.bf16.msra.mxu0 0
        %1414 = vmatprep.subr.bf16.mxu0 0
        %1415 = vmatpush2.bf16.msra.mxu0 0
        %1416 = vmatprep.subr.bf16.mxu0 0
        %1417 = vmatpush2.bf16.msra.mxu0 0
        %1418 = vmatprep.subr.bf16.mxu0 0
        %1419 = vmatpush2.bf16.msra.mxu0 0
        %1420 = vmatprep.subr.bf16.mxu0 0
        %1421 = vmatpush2.bf16.msra.mxu0 0
        %1422 = vmatprep.subr.bf16.mxu0 0
        %1423 = vmatpush2.bf16.msra.mxu0 0
        %1424 = vmatprep.mubr.bf16.mxu0 0
        %1425 = vmatmul.mubr.bf16.gmra.mxu0 %v1390
        %v1426 = vpop.f32.mrf.mxu0
        %v1427 = vadd.f32 %v1362, %v1426
        %v1428 = vpop.f32.mrf.mxu0
        %v1429 = vpop.f32.mrf.mxu0
        %v1430 = vpop.f32.mrf.mxu0
        %1431 = vdwg.mxu0
        %v1432 = vadd.f32 %v1243, %v1427
        %1433 = vst.msk [vmem:[%s584] sm:$0xff] %vm596, %v1432
        %s1434 = sand.u32 %s345, 1
        %s1435 = scalar_lea.sflag [#allocation4], %s1434
        %s1436 = sand.u32 %s345, 1
        %s1437 = smul.addr %s1436, 8
        %s1438 = scalar_lea.vmem [#allocation17], %s1437
        // Predicated region
        $region113: #{encoder_layer_forward.1} parent=75 // pred_check
          %p1439 = pneg %p355
        $region114: #{encoder_layer_forward.1} parent=75 // pred_check_branch
          %1441 = sbr.rel (%p1439) target = $region116
        $region115: #{encoder_layer_forward.1} parent=75 // pred_region
          %s1443 = ssub.s32 128, 128
          %1444 = vsyncadd %s1435, %s1443
          %s1445 = smul.addr %s33, 128
          %s1446 = scalar_lea.hbm %s14, %s1445
          %s1448 = sshll.u32 %s1438, 4
          %s1449 = int_to_ptr.vmem [resolvable:$true] %s1448
          %1451 = dma.vmem_to_hbm [thread:$0]  %s1449, 128, %s1446, %s1435
        $region116: #{encoder_layer_forward.1} parent=75 // pred_fallthru
          _
      $region76: #{encoder_layer_forward.1} parent=5 // pred_fallthru
        _
      %p1452 = scmp.le.s32.totalorder 2, %s28
      // Predicated region
      $region117: #{encoder_layer_forward.1} parent=5 // pred_check
        %p1453 = pneg %p1452
      $region118: #{encoder_layer_forward.1} parent=5 // pred_check_branch
        %1455 = sbr.rel (%p1453) target = $region120
      $region119: #{encoder_layer_forward.1} parent=5 // pred_region
        %s1456 = ssub.s32 %s28, 2
        // Predicated region
        $region121: #{encoder_layer_forward.1} parent=119 // pred_check
          %p1457 = pneg %p361
        $region122: #{encoder_layer_forward.1} parent=119 // pred_check_branch
          %1459 = sbr.rel (%p1457) target = $region124
        $region123: #{encoder_layer_forward.1} parent=119 // pred_region
          %s1460 = sand.u32 %s346, 1
          %s1461 = scalar_lea.sflag [#allocation4], %s1460
          %s1462 = sand.u32 %s346, 1
          %s1463 = smul.addr %s1462, 8
          %s1464 = scalar_lea.vmem [#allocation17], %s1463
          %1465 = dma.done %s1461, 128
        $region124: #{encoder_layer_forward.1} parent=119 // pred_fallthru
          _
      $region120: #{encoder_layer_forward.1} parent=5 // pred_fallthru
        _
    $region6: #{encoder_layer_forward.1} parent=1 // loop_footer
      %s32 = sadd.s32 1, %s28
    $region7: #{encoder_layer_forward.1} parent=1 // loop_footer_branch
      %27 = sbr.rel target = $region3
    $region8: #{encoder_layer_forward.1} parent=1 // loop_exit
      _
    %1466 = vsyncpa [#allocation3], 1
    %s1467 = scalar_lea.sflag [#allocation3], 1
    %1468 = vsyncpa %s1467, 1
    %1469 = vsyncpa [#allocation6], 1
    %1470 = vsyncpa [#allocation9], 1
    %1471 = vsyncpa [#allocation12], 1
    %1472 = vsyncpa [#allocation15], 1
    %1473 = vsyncpa [#allocation4], 1
    %s1474 = scalar_lea.sflag [#allocation4], 1
    %1475 = vsyncpa %s1474, 1

</llo_original>
